<compile_context>
chip_gen: v7x
topology: tpu7x:2x2x1
jax: 0.10.0
libtpu: 0.0.40
codegen_flags: <defaults>
</compile_context>

<pallas_src>
import functools

import jax
import jax.numpy as jnp
from jax.experimental import pallas as pl
from jax.experimental.pallas import tpu as pltpu


def _triplet_kernel(margin, x_ref, sqcol_ref, sqrow_ref, tcol_ref, trow_ref,
                    loss_ref):
    """All chunks in one shot: hard-example triplet loss, summed over chunks."""
    x = x_ref[...]                                    # (C, n, D) f32 features
    sq_col = sqcol_ref[...]                           # (C, n, 1) f32 ||x_i||^2
    sq_row = sqrow_ref[...]                           # (C, 1, n) f32 ||x_j||^2
    same = tcol_ref[...] == trow_ref[...]             # (C, n, n) label mask

    # Batched Gram matrices on the MXU (contract feature axis, batch = chunks).
    g = jnp.einsum('cnd,cmd->cnm', x, x, preferred_element_type=jnp.float32)

    # d2[c,i,j] = sq[c,i] + sq[c,j] - 2 g[c,i,j].  sq_row (index j) is constant
    # along the axis=1 (i) mining reduction, so mine on m = sq_col - 2 g and add
    # sq_row only to the (C,1,n) winners.  d2 and `same` are symmetric (both
    # norms come from the same precomputed sq), so axis=1 mining per anchor j
    # equals the reference's row-wise mining.
    m = sq_col - 2.0 * g                              # (C, n, n)

    ap_m = jnp.max(jnp.where(same, m, -jnp.inf), axis=1, keepdims=True)  # (C,1,n)
    an_m = jnp.min(jnp.where(same, jnp.inf, m), axis=1, keepdims=True)   # (C,1,n)

    # sqrt is monotone: clamp+sqrt only on the winners.
    dist_ap = jnp.sqrt(jnp.maximum(ap_m + sq_row, 1e-12))
    dist_an = jnp.sqrt(jnp.maximum(an_m + sq_row, 1e-12))

    # Note: if a chunk has no negative for some anchor (entire chunk one class),
    # an_m stays +inf and that anchor's hinge is 0 (same as the JAX reference;
    # the torch reference would crash on that input).
    # MarginRankingLoss(dist_an, dist_ap, y=1): max(0, dist_ap - dist_an + margin)
    hinge = jnp.maximum(dist_ap - dist_an + margin, 0.0)   # (C, 1, n)

    n = hinge.shape[-1]
    per_anchor = jnp.sum(hinge, axis=0)                    # (1, n) sum over chunks (VPU)
    total = jnp.sum(per_anchor, axis=1, keepdims=True)     # (1, 1) single lane reduce
    # sum over chunks of per-chunk means (all chunks have n anchors).
    loss_ref[...] = total * (1.0 / n)


def triplet_losses_fused(x3, t3, margin):
    """Single pallas_call over all chunks; returns the summed scalar loss."""
    num_chunks, n, d = x3.shape
    sq = jnp.sum(x3 * x3, axis=-1)                    # (C, n) squared row norms
    sq_col3 = sq[:, :, None]                          # (C, n, 1)
    sq_row3 = sq[:, None, :]                          # (C, 1, n) lane-dense
    t_col3 = t3[:, :, None]                           # (C, n, 1) int32
    t_row3 = t3[:, None, :]                           # (C, 1, n) int32

    kernel = functools.partial(_triplet_kernel, float(margin))
    vmem = pl.BlockSpec(memory_space=pltpu.MemorySpace.VMEM)   # whole array in VMEM
    loss = pl.pallas_call(
        kernel,
        out_shape=jax.ShapeDtypeStruct((1, 1), jnp.float32),
        in_specs=[vmem, vmem, vmem, vmem, vmem],
        out_specs=vmem,
    )(x3, sq_col3, sq_row3, t_col3, t_row3)
    return loss[0, 0]


def triplet_loss_forward(inputss, targetss, uu, margin=0.5, batch_size=128,
                         num_chunks=5):
    """Mirrors TripletLoss.forward: shuffle, 5 chunks, summed per-chunk losses."""
    mm = inputss.shape[0]
    # TODO(synk): torch.manual_seed(uu) + torch.randperm cannot be bit-reproduced
    # in JAX; jax.random.permutation keyed by uu gives the same semantics with a
    # different permutation.
    shuf = jax.random.permutation(jax.random.PRNGKey(uu), mm)
    xs = inputss[shuf]
    ts = targetss[shuf]

    # TODO(synk): only the reference's in-range branch (batch_size*(i+1) < mm) is
    # implemented; the else-branch slices an empty tail and would crash in torch.
    assert batch_size * num_chunks < mm, "need mm > num_chunks * batch_size"
    x3 = xs[: num_chunks * batch_size].reshape(
        num_chunks, batch_size, -1).astype(jnp.float32)
    t3 = ts[: num_chunks * batch_size].reshape(
        num_chunks, batch_size).astype(jnp.int32)
    return triplet_losses_fused(x3, t3, margin)


def _chunk_loss_ref(inputs, targets, margin):
    """Pure-JAX reference of one chunk, for a correctness check."""
    sq = jnp.sum(inputs * inputs, axis=1, keepdims=True)
    d2 = sq + sq.T - 2.0 * inputs @ inputs.T
    dist = jnp.sqrt(jnp.maximum(d2, 1e-12))
    mask = targets[:, None] == targets[None, :]
    ap = jnp.max(jnp.where(mask, dist, -jnp.inf), axis=1)
    an = jnp.min(jnp.where(mask, jnp.inf, dist), axis=1)
    return jnp.mean(jnp.maximum(ap - an + margin, 0.0))


if __name__ == "__main__":
    # Small, module-consistent shapes: (N, D) features, (N,) integer labels.
    # batch_size is scaled 1000 -> 128 so 5 chunks fit (mm > 5 * batch_size).
    N, D, NUM_CLASSES, BATCH = 768, 32, 8, 128
    MARGIN, UU = 0.5, 0

    key = jax.random.PRNGKey(0)
    k_feat, k_lab = jax.random.split(key)
    inputss = jax.random.normal(k_feat, (N, D), dtype=jnp.float32)
    targetss = jax.random.randint(k_lab, (N,), 0, NUM_CLASSES, dtype=jnp.int32)

    loss = triplet_loss_forward(inputss, targetss, UU, margin=MARGIN,
                                batch_size=BATCH)
    loss = jax.block_until_ready(loss)

    # Cross-check the Pallas hot path against the pure-JAX reference.
    shuf = jax.random.permutation(jax.random.PRNGKey(UU), N)
    xs, ts = inputss[shuf], targetss[shuf]
    ref = sum(
        _chunk_loss_ref(xs[BATCH * i:BATCH * (i + 1)],
                        ts[BATCH * i:BATCH * (i + 1)], MARGIN)
        for i in range(5))
    assert jnp.allclose(loss, ref, rtol=1e-4, atol=1e-4), (loss, ref)

    print("KERNEL_OK")
</pallas_src>

<mosaic_0001>
module attributes {stable_mosaic.version = 11 : i64} {
  func.func @_triplet_kernel(%arg0: memref<5x128x32xf32, #tpu.memory_space<vmem>>, %arg1: memref<5x128x1xf32, #tpu.memory_space<vmem>>, %arg2: memref<5x1x128xf32, #tpu.memory_space<vmem>>, %arg3: memref<5x128x1xi32, #tpu.memory_space<vmem>>, %arg4: memref<5x1x128xi32, #tpu.memory_space<vmem>>, %arg5: memref<1x1xf32, #tpu.memory_space<vmem>>) attributes {dimension_semantics = [], scalar_prefetch = 0 : i64, scratch_operands = 0 : i64, tpu.core_type = #tpu.core_type<tc>} {
    %c0 = arith.constant 0 : index
    %c0_0 = arith.constant 0 : index
    %c0_1 = arith.constant 0 : index
    %0 = vector.load %arg0[%c0, %c0_0, %c0_1] : memref<5x128x32xf32, #tpu.memory_space<vmem>>, vector<5x128x32xf32>
    %c0_2 = arith.constant 0 : index
    %c0_3 = arith.constant 0 : index
    %c0_4 = arith.constant 0 : index
    %1 = vector.load %arg1[%c0_2, %c0_3, %c0_4] : memref<5x128x1xf32, #tpu.memory_space<vmem>>, vector<5x128x1xf32>
    %c0_5 = arith.constant 0 : index
    %c0_6 = arith.constant 0 : index
    %c0_7 = arith.constant 0 : index
    %2 = vector.load %arg2[%c0_5, %c0_6, %c0_7] : memref<5x1x128xf32, #tpu.memory_space<vmem>>, vector<5x1x128xf32>
    %c0_8 = arith.constant 0 : index
    %c0_9 = arith.constant 0 : index
    %c0_10 = arith.constant 0 : index
    %3 = vector.load %arg3[%c0_8, %c0_9, %c0_10] : memref<5x128x1xi32, #tpu.memory_space<vmem>>, vector<5x128x1xi32>
    %c0_11 = arith.constant 0 : index
    %c0_12 = arith.constant 0 : index
    %c0_13 = arith.constant 0 : index
    %4 = vector.load %arg4[%c0_11, %c0_12, %c0_13] : memref<5x1x128xi32, #tpu.memory_space<vmem>>, vector<5x1x128xi32>
    %5 = vector.broadcast %3 : vector<5x128x1xi32> to vector<5x128x128xi32>
    %6 = vector.broadcast %4 : vector<5x1x128xi32> to vector<5x128x128xi32>
    %7 = arith.cmpi eq, %5, %6 : vector<5x128x128xi32>
    "tpu.trace_start"() <{level = 10 : i32, message = "cnd,cmd->cnm"}> : () -> ()
    %cst = arith.constant dense<0.000000e+00> : vector<5x128x128xf32>
    %8 = tpu.matmul %0, %0, %cst {dimension_numbers = #tpu.dot_dimension_numbers<[2], [2], [1], [1], [0, 0, 0, 1, 1, 1], [0], [0]>} : vector<5x128x32xf32>, vector<5x128x32xf32>, vector<5x128x128xf32> -> vector<5x128x128xf32>
    "tpu.trace_stop"() : () -> ()
    %cst_14 = arith.constant 2.000000e+00 : f32
    %9 = vector.broadcast %cst_14 : f32 to vector<5x128x128xf32>
    %10 = arith.mulf %9, %8 : vector<5x128x128xf32>
    %11 = vector.broadcast %1 : vector<5x128x1xf32> to vector<5x128x128xf32>
    %12 = arith.subf %11, %10 : vector<5x128x128xf32>
    %cst_15 = arith.constant 0xFF800000 : f32
    %13 = vector.broadcast %cst_15 : f32 to vector<5x128x128xf32>
    %14 = arith.select %7, %12, %13 : vector<5x128x128xi1>, vector<5x128x128xf32>
    %cst_16 = arith.constant dense<0xFF800000> : vector<5x128xf32>
    %15 = vector.multi_reduction <maximumf>, %14, %cst_16 [1] : vector<5x128x128xf32> to vector<5x128xf32>
    %16 = vector.shape_cast %15 : vector<5x128xf32> to vector<5x1x128xf32>
    %cst_17 = arith.constant 0x7F800000 : f32
    %17 = vector.broadcast %cst_17 : f32 to vector<5x128x128xf32>
    %18 = arith.select %7, %17, %12 : vector<5x128x128xi1>, vector<5x128x128xf32>
    %cst_18 = arith.constant dense<0x7F800000> : vector<5x128xf32>
    %19 = vector.multi_reduction <minimumf>, %18, %cst_18 [1] : vector<5x128x128xf32> to vector<5x128xf32>
    %20 = vector.shape_cast %19 : vector<5x128xf32> to vector<5x1x128xf32>
    %21 = arith.addf %16, %2 : vector<5x1x128xf32>
    %cst_19 = arith.constant 9.99999996E-13 : f32
    %22 = vector.broadcast %cst_19 : f32 to vector<5x1x128xf32>
    %23 = arith.maximumf %21, %22 : vector<5x1x128xf32>
    %24 = math.sqrt %23 : vector<5x1x128xf32>
    %25 = arith.addf %20, %2 : vector<5x1x128xf32>
    %cst_20 = arith.constant 9.99999996E-13 : f32
    %26 = vector.broadcast %cst_20 : f32 to vector<5x1x128xf32>
    %27 = arith.maximumf %25, %26 : vector<5x1x128xf32>
    %28 = math.sqrt %27 : vector<5x1x128xf32>
    %29 = arith.subf %24, %28 : vector<5x1x128xf32>
    %cst_21 = arith.constant 5.000000e-01 : f32
    %30 = vector.broadcast %cst_21 : f32 to vector<5x1x128xf32>
    %31 = arith.addf %29, %30 : vector<5x1x128xf32>
    %cst_22 = arith.constant 0.000000e+00 : f32
    %32 = vector.broadcast %cst_22 : f32 to vector<5x1x128xf32>
    %33 = arith.maximumf %31, %32 : vector<5x1x128xf32>
    %cst_23 = arith.constant dense<0.000000e+00> : vector<1x128xf32>
    %34 = vector.multi_reduction <add>, %33, %cst_23 [0] : vector<5x1x128xf32> to vector<1x128xf32>
    %cst_24 = arith.constant dense<0.000000e+00> : vector<1xf32>
    %35 = vector.multi_reduction <add>, %34, %cst_24 [1] : vector<1x128xf32> to vector<1xf32>
    %36 = vector.shape_cast %35 : vector<1xf32> to vector<1x1xf32>
    %cst_25 = arith.constant 7.812500e-03 : f32
    %37 = vector.broadcast %cst_25 : f32 to vector<1x1xf32>
    %38 = arith.mulf %36, %37 : vector<1x1xf32>
    %c0_26 = arith.constant 0 : index
    %c0_27 = arith.constant 0 : index
    %39 = vector.load %arg5[%c0_26, %c0_27] : memref<1x1xf32, #tpu.memory_space<vmem>>, vector<1x1xf32>
    tpu.vector_store %arg5[%c0_26, %c0_27], %38 {strides = array<i32>} : memref<1x1xf32, #tpu.memory_space<vmem>>, vector<1x1xf32>,
    return
  }
}

</mosaic_0001>

<llo_original>
// kernel: tpu_custom_call.1
$region0: #{tpu_custom_call.1}
  #allocation0 [shape = 'u32[]', space=smem, size = 0x4, offset = 0x4, fixed_abs, tag = 'smem constant byte address 0x4 - core index']
  #allocation1 [shape = 'u32[144,128]{1,0:T(1,128)}', space=vmem, size = 0x12000, scoped, tag = 'internal scratch']
  %s0 = inlined_call_operand.vmem [shape: f32[5,128,32], index: 0, kind: input, shape index: {}]
  %s1 = inlined_call_operand.vmem [shape: f32[5,128,1], index: 1, kind: input, shape index: {}]
  %s2 = inlined_call_operand.vmem [shape: f32[5,1,128], index: 2, kind: input, shape index: {}]
  %s3 = inlined_call_operand.vmem [shape: s32[5,128,1], index: 3, kind: input, shape index: {}]
  %s4 = inlined_call_operand.vmem [shape: s32[5,1,128], index: 4, kind: input, shape index: {}]
  %s5 = inlined_call_operand.hbm [shape: f32[1,1], index: 5, kind: output, shape index: {}]
  %s6 = sld [smem:[#allocation0]]
  $region30: #{tpu_custom_call.1} parent=0
    _
  %s8 = ssub.s32 1, %s6
  %s9 = scalar_select 0, %s8, %s6
  $region1: #{tpu_custom_call.1} parent=0
    #allocation2 [shape = 'u8[512]{0}', space=vmem, size = 0x400, scoped, tag = 'output window, operand 0, single buffered']
    #allocation3 [shape = 's32[1]{0}', space=sflag, size = 0x4, scoped, tag = 'scoped memory for tpu_custom_call.1']
    %10 = vsyncpa [#allocation3], 0
    // Predicated region
    $region2: #{tpu_custom_call.1} parent=1 // pred_check
      _
    $region3: #{tpu_custom_call.1} parent=1 // pred_check_branch
      %12 = sbr.rel (0) target = $region5
    $region4: #{tpu_custom_call.1} parent=1 // pred_region
      _
    $region5: #{tpu_custom_call.1} parent=1 // pred_fallthru
      _
    // Predicated region
    $region6: #{tpu_custom_call.1} parent=1 // pred_check
      _
    $region7: #{tpu_custom_call.1} parent=1 // pred_check_branch
      %14 = sbr.rel (0) target = $region9
    $region8: #{tpu_custom_call.1} parent=1 // pred_region
      _
    $region9: #{tpu_custom_call.1} parent=1 // pred_fallthru
      _
    // Predicated region
    $region10: #{tpu_custom_call.1} parent=1 // pred_check
      _
    $region11: #{tpu_custom_call.1} parent=1 // pred_check_branch
      %16 = sbr.rel (0) target = $region13
    $region12: #{tpu_custom_call.1} parent=1 // pred_region
      _
    $region13: #{tpu_custom_call.1} parent=1 // pred_fallthru
      _
    // Predicated region
    $region14: #{tpu_custom_call.1} parent=1 // pred_check
      _
    $region15: #{tpu_custom_call.1} parent=1 // pred_check_branch
      %18 = sbr.rel (0) target = $region17
    $region16: #{tpu_custom_call.1} parent=1 // pred_region
      _
    $region17: #{tpu_custom_call.1} parent=1 // pred_fallthru
      _
    // Predicated region
    $region18: #{tpu_custom_call.1} parent=1 // pred_check
      _
    $region19: #{tpu_custom_call.1} parent=1 // pred_check_branch
      %20 = sbr.rel (0) target = $region21
    $region20: #{tpu_custom_call.1} parent=1 // pred_region
      _
    $region21: #{tpu_custom_call.1} parent=1 // pred_fallthru
      _
    %v21 = vld [vmem:[%s0] sm:$0xff]
    %v22 = vld [vmem:[%s0 + $0x8] sm:$0xff]
    %v23 = vld [vmem:[%s0 + $0x10] sm:$0xff]
    %v24 = vld [vmem:[%s0 + $0x18] sm:$0xff]
    %v25 = vld [vmem:[%s0 + $0x20] sm:$0xff]
    %v26 = vld [vmem:[%s0 + $0x28] sm:$0xff]
    %v27 = vld [vmem:[%s0 + $0x30] sm:$0xff]
    %v28 = vld [vmem:[%s0 + $0x38] sm:$0xff]
    %v29 = vld [vmem:[%s0 + $0x40] sm:$0xff]
    %v30 = vld [vmem:[%s0 + $0x48] sm:$0xff]
    %v31 = vld [vmem:[%s0 + $0x50] sm:$0xff]
    %v32 = vld [vmem:[%s0 + $0x58] sm:$0xff]
    %v33 = vld [vmem:[%s0 + $0x60] sm:$0xff]
    %v34 = vld [vmem:[%s0 + $0x68] sm:$0xff]
    %v35 = vld [vmem:[%s0 + $0x70] sm:$0xff]
    %v36 = vld [vmem:[%s0 + $0x78] sm:$0xff]
    %v37 = vld [vmem:[%s0 + $0x80] sm:$0xff]
    %v38 = vld [vmem:[%s0 + $0x88] sm:$0xff]
    %v39 = vld [vmem:[%s0 + $0x90] sm:$0xff]
    %v40 = vld [vmem:[%s0 + $0x98] sm:$0xff]
    %v41 = vld [vmem:[%s0 + $0xa0] sm:$0xff]
    %v42 = vld [vmem:[%s0 + $0xa8] sm:$0xff]
    %v43 = vld [vmem:[%s0 + $0xb0] sm:$0xff]
    %v44 = vld [vmem:[%s0 + $0xb8] sm:$0xff]
    %v45 = vld [vmem:[%s0 + $0xc0] sm:$0xff]
    %v46 = vld [vmem:[%s0 + $0xc8] sm:$0xff]
    %v47 = vld [vmem:[%s0 + $0xd0] sm:$0xff]
    %v48 = vld [vmem:[%s0 + $0xd8] sm:$0xff]
    %v49 = vld [vmem:[%s0 + $0xe0] sm:$0xff]
    %v50 = vld [vmem:[%s0 + $0xe8] sm:$0xff]
    %v51 = vld [vmem:[%s0 + $0xf0] sm:$0xff]
    %v52 = vld [vmem:[%s0 + $0xf8] sm:$0xff]
    %v53 = vld [vmem:[%s0 + $0x100] sm:$0xff]
    %v54 = vld [vmem:[%s0 + $0x108] sm:$0xff]
    %v55 = vld [vmem:[%s0 + $0x110] sm:$0xff]
    %v56 = vld [vmem:[%s0 + $0x118] sm:$0xff]
    %v57 = vld [vmem:[%s0 + $0x120] sm:$0xff]
    %v58 = vld [vmem:[%s0 + $0x128] sm:$0xff]
    %v59 = vld [vmem:[%s0 + $0x130] sm:$0xff]
    %v60 = vld [vmem:[%s0 + $0x138] sm:$0xff]
    %v61 = vld [vmem:[%s0 + $0x140] sm:$0xff]
    %v62 = vld [vmem:[%s0 + $0x148] sm:$0xff]
    %v63 = vld [vmem:[%s0 + $0x150] sm:$0xff]
    %v64 = vld [vmem:[%s0 + $0x158] sm:$0xff]
    %v65 = vld [vmem:[%s0 + $0x160] sm:$0xff]
    %v66 = vld [vmem:[%s0 + $0x168] sm:$0xff]
    %v67 = vld [vmem:[%s0 + $0x170] sm:$0xff]
    %v68 = vld [vmem:[%s0 + $0x178] sm:$0xff]
    %v69 = vld [vmem:[%s0 + $0x180] sm:$0xff]
    %v70 = vld [vmem:[%s0 + $0x188] sm:$0xff]
    %v71 = vld [vmem:[%s0 + $0x190] sm:$0xff]
    %v72 = vld [vmem:[%s0 + $0x198] sm:$0xff]
    %v73 = vld [vmem:[%s0 + $0x1a0] sm:$0xff]
    %v74 = vld [vmem:[%s0 + $0x1a8] sm:$0xff]
    %v75 = vld [vmem:[%s0 + $0x1b0] sm:$0xff]
    %v76 = vld [vmem:[%s0 + $0x1b8] sm:$0xff]
    %v77 = vld [vmem:[%s0 + $0x1c0] sm:$0xff]
    %v78 = vld [vmem:[%s0 + $0x1c8] sm:$0xff]
    %v79 = vld [vmem:[%s0 + $0x1d0] sm:$0xff]
    %v80 = vld [vmem:[%s0 + $0x1d8] sm:$0xff]
    %v81 = vld [vmem:[%s0 + $0x1e0] sm:$0xff]
    %v82 = vld [vmem:[%s0 + $0x1e8] sm:$0xff]
    %v83 = vld [vmem:[%s0 + $0x1f0] sm:$0xff]
    %v84 = vld [vmem:[%s0 + $0x1f8] sm:$0xff]
    %v85 = vld [vmem:[%s0 + $0x200] sm:$0xff]
    %v86 = vld [vmem:[%s0 + $0x208] sm:$0xff]
    %v87 = vld [vmem:[%s0 + $0x210] sm:$0xff]
    %v88 = vld [vmem:[%s0 + $0x218] sm:$0xff]
    %v89 = vld [vmem:[%s0 + $0x220] sm:$0xff]
    %v90 = vld [vmem:[%s0 + $0x228] sm:$0xff]
    %v91 = vld [vmem:[%s0 + $0x230] sm:$0xff]
    %v92 = vld [vmem:[%s0 + $0x238] sm:$0xff]
    %v93 = vld [vmem:[%s0 + $0x240] sm:$0xff]
    %v94 = vld [vmem:[%s0 + $0x248] sm:$0xff]
    %v95 = vld [vmem:[%s0 + $0x250] sm:$0xff]
    %v96 = vld [vmem:[%s0 + $0x258] sm:$0xff]
    %v97 = vld [vmem:[%s0 + $0x260] sm:$0xff]
    %v98 = vld [vmem:[%s0 + $0x268] sm:$0xff]
    %v99 = vld [vmem:[%s0 + $0x270] sm:$0xff]
    %v100 = vld [vmem:[%s0 + $0x278] sm:$0xff]
    %v101 = vld [vmem:[%s1] sm:$0xff]
    %v102 = vld [vmem:[%s1 + $0x8] sm:$0xff]
    %v103 = vld [vmem:[%s1 + $0x10] sm:$0xff]
    %v104 = vld [vmem:[%s1 + $0x18] sm:$0xff]
    %v105 = vld [vmem:[%s1 + $0x20] sm:$0xff]
    %v106 = vld [vmem:[%s1 + $0x28] sm:$0xff]
    %v107 = vld [vmem:[%s1 + $0x30] sm:$0xff]
    %v108 = vld [vmem:[%s1 + $0x38] sm:$0xff]
    %v109 = vld [vmem:[%s1 + $0x40] sm:$0xff]
    %v110 = vld [vmem:[%s1 + $0x48] sm:$0xff]
    %v111 = vld [vmem:[%s1 + $0x50] sm:$0xff]
    %v112 = vld [vmem:[%s1 + $0x58] sm:$0xff]
    %v113 = vld [vmem:[%s1 + $0x60] sm:$0xff]
    %v114 = vld [vmem:[%s1 + $0x68] sm:$0xff]
    %v115 = vld [vmem:[%s1 + $0x70] sm:$0xff]
    %v116 = vld [vmem:[%s1 + $0x78] sm:$0xff]
    %v117 = vld [vmem:[%s1 + $0x80] sm:$0xff]
    %v118 = vld [vmem:[%s1 + $0x88] sm:$0xff]
    %v119 = vld [vmem:[%s1 + $0x90] sm:$0xff]
    %v120 = vld [vmem:[%s1 + $0x98] sm:$0xff]
    %v121 = vld [vmem:[%s1 + $0xa0] sm:$0xff]
    %v122 = vld [vmem:[%s1 + $0xa8] sm:$0xff]
    %v123 = vld [vmem:[%s1 + $0xb0] sm:$0xff]
    %v124 = vld [vmem:[%s1 + $0xb8] sm:$0xff]
    %v125 = vld [vmem:[%s1 + $0xc0] sm:$0xff]
    %v126 = vld [vmem:[%s1 + $0xc8] sm:$0xff]
    %v127 = vld [vmem:[%s1 + $0xd0] sm:$0xff]
    %v128 = vld [vmem:[%s1 + $0xd8] sm:$0xff]
    %v129 = vld [vmem:[%s1 + $0xe0] sm:$0xff]
    %v130 = vld [vmem:[%s1 + $0xe8] sm:$0xff]
    %v131 = vld [vmem:[%s1 + $0xf0] sm:$0xff]
    %v132 = vld [vmem:[%s1 + $0xf8] sm:$0xff]
    %v133 = vld [vmem:[%s1 + $0x100] sm:$0xff]
    %v134 = vld [vmem:[%s1 + $0x108] sm:$0xff]
    %v135 = vld [vmem:[%s1 + $0x110] sm:$0xff]
    %v136 = vld [vmem:[%s1 + $0x118] sm:$0xff]
    %v137 = vld [vmem:[%s1 + $0x120] sm:$0xff]
    %v138 = vld [vmem:[%s1 + $0x128] sm:$0xff]
    %v139 = vld [vmem:[%s1 + $0x130] sm:$0xff]
    %v140 = vld [vmem:[%s1 + $0x138] sm:$0xff]
    %v141 = vld [vmem:[%s1 + $0x140] sm:$0xff]
    %v142 = vld [vmem:[%s1 + $0x148] sm:$0xff]
    %v143 = vld [vmem:[%s1 + $0x150] sm:$0xff]
    %v144 = vld [vmem:[%s1 + $0x158] sm:$0xff]
    %v145 = vld [vmem:[%s1 + $0x160] sm:$0xff]
    %v146 = vld [vmem:[%s1 + $0x168] sm:$0xff]
    %v147 = vld [vmem:[%s1 + $0x170] sm:$0xff]
    %v148 = vld [vmem:[%s1 + $0x178] sm:$0xff]
    %v149 = vld [vmem:[%s1 + $0x180] sm:$0xff]
    %v150 = vld [vmem:[%s1 + $0x188] sm:$0xff]
    %v151 = vld [vmem:[%s1 + $0x190] sm:$0xff]
    %v152 = vld [vmem:[%s1 + $0x198] sm:$0xff]
    %v153 = vld [vmem:[%s1 + $0x1a0] sm:$0xff]
    %v154 = vld [vmem:[%s1 + $0x1a8] sm:$0xff]
    %v155 = vld [vmem:[%s1 + $0x1b0] sm:$0xff]
    %v156 = vld [vmem:[%s1 + $0x1b8] sm:$0xff]
    %v157 = vld [vmem:[%s1 + $0x1c0] sm:$0xff]
    %v158 = vld [vmem:[%s1 + $0x1c8] sm:$0xff]
    %v159 = vld [vmem:[%s1 + $0x1d0] sm:$0xff]
    %v160 = vld [vmem:[%s1 + $0x1d8] sm:$0xff]
    %v161 = vld [vmem:[%s1 + $0x1e0] sm:$0xff]
    %v162 = vld [vmem:[%s1 + $0x1e8] sm:$0xff]
    %v163 = vld [vmem:[%s1 + $0x1f0] sm:$0xff]
    %v164 = vld [vmem:[%s1 + $0x1f8] sm:$0xff]
    %v165 = vld [vmem:[%s1 + $0x200] sm:$0xff]
    %v166 = vld [vmem:[%s1 + $0x208] sm:$0xff]
    %v167 = vld [vmem:[%s1 + $0x210] sm:$0xff]
    %v168 = vld [vmem:[%s1 + $0x218] sm:$0xff]
    %v169 = vld [vmem:[%s1 + $0x220] sm:$0xff]
    %v170 = vld [vmem:[%s1 + $0x228] sm:$0xff]
    %v171 = vld [vmem:[%s1 + $0x230] sm:$0xff]
    %v172 = vld [vmem:[%s1 + $0x238] sm:$0xff]
    %v173 = vld [vmem:[%s1 + $0x240] sm:$0xff]
    %v174 = vld [vmem:[%s1 + $0x248] sm:$0xff]
    %v175 = vld [vmem:[%s1 + $0x250] sm:$0xff]
    %v176 = vld [vmem:[%s1 + $0x258] sm:$0xff]
    %v177 = vld [vmem:[%s1 + $0x260] sm:$0xff]
    %v178 = vld [vmem:[%s1 + $0x268] sm:$0xff]
    %v179 = vld [vmem:[%s1 + $0x270] sm:$0xff]
    %v180 = vld [vmem:[%s1 + $0x278] sm:$0xff]
    %v181 = vld [vmem:[%s2] sm:$0x1]
    %v182 = vld [vmem:[%s2 + $0x1] sm:$0x1]
    %v183 = vld [vmem:[%s2 + $0x2] sm:$0x1]
    %v184 = vld [vmem:[%s2 + $0x3] sm:$0x1]
    %v185 = vld [vmem:[%s2 + $0x4] sm:$0x1]
    %v186 = vld [vmem:[%s3] sm:$0xff]
    %v187 = vld [vmem:[%s3 + $0x8] sm:$0xff]
    %v188 = vld [vmem:[%s3 + $0x10] sm:$0xff]
    %v189 = vld [vmem:[%s3 + $0x18] sm:$0xff]
    %v190 = vld [vmem:[%s3 + $0x20] sm:$0xff]
    %v191 = vld [vmem:[%s3 + $0x28] sm:$0xff]
    %v192 = vld [vmem:[%s3 + $0x30] sm:$0xff]
    %v193 = vld [vmem:[%s3 + $0x38] sm:$0xff]
    %v194 = vld [vmem:[%s3 + $0x40] sm:$0xff]
    %v195 = vld [vmem:[%s3 + $0x48] sm:$0xff]
    %v196 = vld [vmem:[%s3 + $0x50] sm:$0xff]
    %v197 = vld [vmem:[%s3 + $0x58] sm:$0xff]
    %v198 = vld [vmem:[%s3 + $0x60] sm:$0xff]
    %v199 = vld [vmem:[%s3 + $0x68] sm:$0xff]
    %v200 = vld [vmem:[%s3 + $0x70] sm:$0xff]
    %v201 = vld [vmem:[%s3 + $0x78] sm:$0xff]
    %v202 = vld [vmem:[%s3 + $0x80] sm:$0xff]
    %v203 = vld [vmem:[%s3 + $0x88] sm:$0xff]
    %v204 = vld [vmem:[%s3 + $0x90] sm:$0xff]
    %v205 = vld [vmem:[%s3 + $0x98] sm:$0xff]
    %v206 = vld [vmem:[%s3 + $0xa0] sm:$0xff]
    %v207 = vld [vmem:[%s3 + $0xa8] sm:$0xff]
    %v208 = vld [vmem:[%s3 + $0xb0] sm:$0xff]
    %v209 = vld [vmem:[%s3 + $0xb8] sm:$0xff]
    %v210 = vld [vmem:[%s3 + $0xc0] sm:$0xff]
    %v211 = vld [vmem:[%s3 + $0xc8] sm:$0xff]
    %v212 = vld [vmem:[%s3 + $0xd0] sm:$0xff]
    %v213 = vld [vmem:[%s3 + $0xd8] sm:$0xff]
    %v214 = vld [vmem:[%s3 + $0xe0] sm:$0xff]
    %v215 = vld [vmem:[%s3 + $0xe8] sm:$0xff]
    %v216 = vld [vmem:[%s3 + $0xf0] sm:$0xff]
    %v217 = vld [vmem:[%s3 + $0xf8] sm:$0xff]
    %v218 = vld [vmem:[%s3 + $0x100] sm:$0xff]
    %v219 = vld [vmem:[%s3 + $0x108] sm:$0xff]
    %v220 = vld [vmem:[%s3 + $0x110] sm:$0xff]
    %v221 = vld [vmem:[%s3 + $0x118] sm:$0xff]
    %v222 = vld [vmem:[%s3 + $0x120] sm:$0xff]
    %v223 = vld [vmem:[%s3 + $0x128] sm:$0xff]
    %v224 = vld [vmem:[%s3 + $0x130] sm:$0xff]
    %v225 = vld [vmem:[%s3 + $0x138] sm:$0xff]
    %v226 = vld [vmem:[%s3 + $0x140] sm:$0xff]
    %v227 = vld [vmem:[%s3 + $0x148] sm:$0xff]
    %v228 = vld [vmem:[%s3 + $0x150] sm:$0xff]
    %v229 = vld [vmem:[%s3 + $0x158] sm:$0xff]
    %v230 = vld [vmem:[%s3 + $0x160] sm:$0xff]
    %v231 = vld [vmem:[%s3 + $0x168] sm:$0xff]
    %v232 = vld [vmem:[%s3 + $0x170] sm:$0xff]
    %v233 = vld [vmem:[%s3 + $0x178] sm:$0xff]
    %v234 = vld [vmem:[%s3 + $0x180] sm:$0xff]
    %v235 = vld [vmem:[%s3 + $0x188] sm:$0xff]
    %v236 = vld [vmem:[%s3 + $0x190] sm:$0xff]
    %v237 = vld [vmem:[%s3 + $0x198] sm:$0xff]
    %v238 = vld [vmem:[%s3 + $0x1a0] sm:$0xff]
    %v239 = vld [vmem:[%s3 + $0x1a8] sm:$0xff]
    %v240 = vld [vmem:[%s3 + $0x1b0] sm:$0xff]
    %v241 = vld [vmem:[%s3 + $0x1b8] sm:$0xff]
    %v242 = vld [vmem:[%s3 + $0x1c0] sm:$0xff]
    %v243 = vld [vmem:[%s3 + $0x1c8] sm:$0xff]
    %v244 = vld [vmem:[%s3 + $0x1d0] sm:$0xff]
    %v245 = vld [vmem:[%s3 + $0x1d8] sm:$0xff]
    %v246 = vld [vmem:[%s3 + $0x1e0] sm:$0xff]
    %v247 = vld [vmem:[%s3 + $0x1e8] sm:$0xff]
    %v248 = vld [vmem:[%s3 + $0x1f0] sm:$0xff]
    %v249 = vld [vmem:[%s3 + $0x1f8] sm:$0xff]
    %v250 = vld [vmem:[%s3 + $0x200] sm:$0xff]
    %v251 = vld [vmem:[%s3 + $0x208] sm:$0xff]
    %v252 = vld [vmem:[%s3 + $0x210] sm:$0xff]
    %v253 = vld [vmem:[%s3 + $0x218] sm:$0xff]
    %v254 = vld [vmem:[%s3 + $0x220] sm:$0xff]
    %v255 = vld [vmem:[%s3 + $0x228] sm:$0xff]
    %v256 = vld [vmem:[%s3 + $0x230] sm:$0xff]
    %v257 = vld [vmem:[%s3 + $0x238] sm:$0xff]
    %v258 = vld [vmem:[%s3 + $0x240] sm:$0xff]
    %v259 = vld [vmem:[%s3 + $0x248] sm:$0xff]
    %v260 = vld [vmem:[%s3 + $0x250] sm:$0xff]
    %v261 = vld [vmem:[%s3 + $0x258] sm:$0xff]
    %v262 = vld [vmem:[%s3 + $0x260] sm:$0xff]
    %v263 = vld [vmem:[%s3 + $0x268] sm:$0xff]
    %v264 = vld [vmem:[%s3 + $0x270] sm:$0xff]
    %v265 = vld [vmem:[%s3 + $0x278] sm:$0xff]
    %v266 = vld [vmem:[%s4] sm:$0x1]
    %v267 = vld [vmem:[%s4 + $0x1] sm:$0x1]
    %v268 = vld [vmem:[%s4 + $0x2] sm:$0x1]
    %v269 = vld [vmem:[%s4 + $0x3] sm:$0x1]
    %v270 = vld [vmem:[%s4 + $0x4] sm:$0x1]
    %271 = vset.pattern.permute.xlu0 0
    %272 = vperm.xlu0 %271, %v186
    %v273 = vpop.permute.xlu0 %272
    %274 = vset.pattern.permute.xlu0 0
    %275 = vperm.xlu0 %274, %v187
    %v276 = vpop.permute.xlu0 %275
    %277 = vset.pattern.permute.xlu0 0
    %278 = vperm.xlu0 %277, %v188
    %v279 = vpop.permute.xlu0 %278
    %280 = vset.pattern.permute.xlu0 0
    %281 = vperm.xlu0 %280, %v189
    %v282 = vpop.permute.xlu0 %281
    %283 = vset.pattern.permute.xlu0 0
    %284 = vperm.xlu0 %283, %v190
    %v285 = vpop.permute.xlu0 %284
    %286 = vset.pattern.permute.xlu0 0
    %287 = vperm.xlu0 %286, %v191
    %v288 = vpop.permute.xlu0 %287
    %289 = vset.pattern.permute.xlu0 0
    %290 = vperm.xlu0 %289, %v192
    %v291 = vpop.permute.xlu0 %290
    %292 = vset.pattern.permute.xlu0 0
    %293 = vperm.xlu0 %292, %v193
    %v294 = vpop.permute.xlu0 %293
    %295 = vset.pattern.permute.xlu0 0
    %296 = vperm.xlu0 %295, %v194
    %v297 = vpop.permute.xlu0 %296
    %298 = vset.pattern.permute.xlu0 0
    %299 = vperm.xlu0 %298, %v195
    %v300 = vpop.permute.xlu0 %299
    %301 = vset.pattern.permute.xlu0 0
    %302 = vperm.xlu0 %301, %v196
    %v303 = vpop.permute.xlu0 %302
    %304 = vset.pattern.permute.xlu0 0
    %305 = vperm.xlu0 %304, %v197
    %v306 = vpop.permute.xlu0 %305
    %307 = vset.pattern.permute.xlu0 0
    %308 = vperm.xlu0 %307, %v198
    %v309 = vpop.permute.xlu0 %308
    %310 = vset.pattern.permute.xlu0 0
    %311 = vperm.xlu0 %310, %v199
    %v312 = vpop.permute.xlu0 %311
    %313 = vset.pattern.permute.xlu0 0
    %314 = vperm.xlu0 %313, %v200
    %v315 = vpop.permute.xlu0 %314
    %316 = vset.pattern.permute.xlu0 0
    %317 = vperm.xlu0 %316, %v201
    %v318 = vpop.permute.xlu0 %317
    %319 = vset.pattern.permute.xlu0 0
    %320 = vperm.xlu0 %319, %v202
    %v321 = vpop.permute.xlu0 %320
    %322 = vset.pattern.permute.xlu0 0
    %323 = vperm.xlu0 %322, %v203
    %v324 = vpop.permute.xlu0 %323
    %325 = vset.pattern.permute.xlu0 0
    %326 = vperm.xlu0 %325, %v204
    %v327 = vpop.permute.xlu0 %326
    %328 = vset.pattern.permute.xlu0 0
    %329 = vperm.xlu0 %328, %v205
    %v330 = vpop.permute.xlu0 %329
    %331 = vset.pattern.permute.xlu0 0
    %332 = vperm.xlu0 %331, %v206
    %v333 = vpop.permute.xlu0 %332
    %334 = vset.pattern.permute.xlu0 0
    %335 = vperm.xlu0 %334, %v207
    %v336 = vpop.permute.xlu0 %335
    %337 = vset.pattern.permute.xlu0 0
    %338 = vperm.xlu0 %337, %v208
    %v339 = vpop.permute.xlu0 %338
    %340 = vset.pattern.permute.xlu0 0
    %341 = vperm.xlu0 %340, %v209
    %v342 = vpop.permute.xlu0 %341
    %343 = vset.pattern.permute.xlu0 0
    %344 = vperm.xlu0 %343, %v210
    %v345 = vpop.permute.xlu0 %344
    %346 = vset.pattern.permute.xlu0 0
    %347 = vperm.xlu0 %346, %v211
    %v348 = vpop.permute.xlu0 %347
    %349 = vset.pattern.permute.xlu0 0
    %350 = vperm.xlu0 %349, %v212
    %v351 = vpop.permute.xlu0 %350
    %352 = vset.pattern.permute.xlu0 0
    %353 = vperm.xlu0 %352, %v213
    %v354 = vpop.permute.xlu0 %353
    %355 = vset.pattern.permute.xlu0 0
    %356 = vperm.xlu0 %355, %v214
    %v357 = vpop.permute.xlu0 %356
    %358 = vset.pattern.permute.xlu0 0
    %359 = vperm.xlu0 %358, %v215
    %v360 = vpop.permute.xlu0 %359
    %361 = vset.pattern.permute.xlu0 0
    %362 = vperm.xlu0 %361, %v216
    %v363 = vpop.permute.xlu0 %362
    %364 = vset.pattern.permute.xlu0 0
    %365 = vperm.xlu0 %364, %v217
    %v366 = vpop.permute.xlu0 %365
    %367 = vset.pattern.permute.xlu0 0
    %368 = vperm.xlu0 %367, %v218
    %v369 = vpop.permute.xlu0 %368
    %370 = vset.pattern.permute.xlu0 0
    %371 = vperm.xlu0 %370, %v219
    %v372 = vpop.permute.xlu0 %371
    %373 = vset.pattern.permute.xlu0 0
    %374 = vperm.xlu0 %373, %v220
    %v375 = vpop.permute.xlu0 %374
    %376 = vset.pattern.permute.xlu0 0
    %377 = vperm.xlu0 %376, %v221
    %v378 = vpop.permute.xlu0 %377
    %379 = vset.pattern.permute.xlu0 0
    %380 = vperm.xlu0 %379, %v222
    %v381 = vpop.permute.xlu0 %380
    %382 = vset.pattern.permute.xlu0 0
    %383 = vperm.xlu0 %382, %v223
    %v384 = vpop.permute.xlu0 %383
    %385 = vset.pattern.permute.xlu0 0
    %386 = vperm.xlu0 %385, %v224
    %v387 = vpop.permute.xlu0 %386
    %388 = vset.pattern.permute.xlu0 0
    %389 = vperm.xlu0 %388, %v225
    %v390 = vpop.permute.xlu0 %389
    %391 = vset.pattern.permute.xlu0 0
    %392 = vperm.xlu0 %391, %v226
    %v393 = vpop.permute.xlu0 %392
    %394 = vset.pattern.permute.xlu0 0
    %395 = vperm.xlu0 %394, %v227
    %v396 = vpop.permute.xlu0 %395
    %397 = vset.pattern.permute.xlu0 0
    %398 = vperm.xlu0 %397, %v228
    %v399 = vpop.permute.xlu0 %398
    %400 = vset.pattern.permute.xlu0 0
    %401 = vperm.xlu0 %400, %v229
    %v402 = vpop.permute.xlu0 %401
    %403 = vset.pattern.permute.xlu0 0
    %404 = vperm.xlu0 %403, %v230
    %v405 = vpop.permute.xlu0 %404
    %406 = vset.pattern.permute.xlu0 0
    %407 = vperm.xlu0 %406, %v231
    %v408 = vpop.permute.xlu0 %407
    %409 = vset.pattern.permute.xlu0 0
    %410 = vperm.xlu0 %409, %v232
    %v411 = vpop.permute.xlu0 %410
    %412 = vset.pattern.permute.xlu0 0
    %413 = vperm.xlu0 %412, %v233
    %v414 = vpop.permute.xlu0 %413
    %415 = vset.pattern.permute.xlu0 0
    %416 = vperm.xlu0 %415, %v234
    %v417 = vpop.permute.xlu0 %416
    %418 = vset.pattern.permute.xlu0 0
    %419 = vperm.xlu0 %418, %v235
    %v420 = vpop.permute.xlu0 %419
    %421 = vset.pattern.permute.xlu0 0
    %422 = vperm.xlu0 %421, %v236
    %v423 = vpop.permute.xlu0 %422
    %424 = vset.pattern.permute.xlu0 0
    %425 = vperm.xlu0 %424, %v237
    %v426 = vpop.permute.xlu0 %425
    %427 = vset.pattern.permute.xlu0 0
    %428 = vperm.xlu0 %427, %v238
    %v429 = vpop.permute.xlu0 %428
    %430 = vset.pattern.permute.xlu0 0
    %431 = vperm.xlu0 %430, %v239
    %v432 = vpop.permute.xlu0 %431
    %433 = vset.pattern.permute.xlu0 0
    %434 = vperm.xlu0 %433, %v240
    %v435 = vpop.permute.xlu0 %434
    %436 = vset.pattern.permute.xlu0 0
    %437 = vperm.xlu0 %436, %v241
    %v438 = vpop.permute.xlu0 %437
    %439 = vset.pattern.permute.xlu0 0
    %440 = vperm.xlu0 %439, %v242
    %v441 = vpop.permute.xlu0 %440
    %442 = vset.pattern.permute.xlu0 0
    %443 = vperm.xlu0 %442, %v243
    %v444 = vpop.permute.xlu0 %443
    %445 = vset.pattern.permute.xlu0 0
    %446 = vperm.xlu0 %445, %v244
    %v447 = vpop.permute.xlu0 %446
    %448 = vset.pattern.permute.xlu0 0
    %449 = vperm.xlu0 %448, %v245
    %v450 = vpop.permute.xlu0 %449
    %451 = vset.pattern.permute.xlu0 0
    %452 = vperm.xlu0 %451, %v246
    %v453 = vpop.permute.xlu0 %452
    %454 = vset.pattern.permute.xlu0 0
    %455 = vperm.xlu0 %454, %v247
    %v456 = vpop.permute.xlu0 %455
    %457 = vset.pattern.permute.xlu0 0
    %458 = vperm.xlu0 %457, %v248
    %v459 = vpop.permute.xlu0 %458
    %460 = vset.pattern.permute.xlu0 0
    %461 = vperm.xlu0 %460, %v249
    %v462 = vpop.permute.xlu0 %461
    %463 = vset.pattern.permute.xlu0 0
    %464 = vperm.xlu0 %463, %v250
    %v465 = vpop.permute.xlu0 %464
    %466 = vset.pattern.permute.xlu0 0
    %467 = vperm.xlu0 %466, %v251
    %v468 = vpop.permute.xlu0 %467
    %469 = vset.pattern.permute.xlu0 0
    %470 = vperm.xlu0 %469, %v252
    %v471 = vpop.permute.xlu0 %470
    %472 = vset.pattern.permute.xlu0 0
    %473 = vperm.xlu0 %472, %v253
    %v474 = vpop.permute.xlu0 %473
    %475 = vset.pattern.permute.xlu0 0
    %476 = vperm.xlu0 %475, %v254
    %v477 = vpop.permute.xlu0 %476
    %478 = vset.pattern.permute.xlu0 0
    %479 = vperm.xlu0 %478, %v255
    %v480 = vpop.permute.xlu0 %479
    %481 = vset.pattern.permute.xlu0 0
    %482 = vperm.xlu0 %481, %v256
    %v483 = vpop.permute.xlu0 %482
    %484 = vset.pattern.permute.xlu0 0
    %485 = vperm.xlu0 %484, %v257
    %v486 = vpop.permute.xlu0 %485
    %487 = vset.pattern.permute.xlu0 0
    %488 = vperm.xlu0 %487, %v258
    %v489 = vpop.permute.xlu0 %488
    %490 = vset.pattern.permute.xlu0 0
    %491 = vperm.xlu0 %490, %v259
    %v492 = vpop.permute.xlu0 %491
    %493 = vset.pattern.permute.xlu0 0
    %494 = vperm.xlu0 %493, %v260
    %v495 = vpop.permute.xlu0 %494
    %496 = vset.pattern.permute.xlu0 0
    %497 = vperm.xlu0 %496, %v261
    %v498 = vpop.permute.xlu0 %497
    %499 = vset.pattern.permute.xlu0 0
    %500 = vperm.xlu0 %499, %v262
    %v501 = vpop.permute.xlu0 %500
    %502 = vset.pattern.permute.xlu0 0
    %503 = vperm.xlu0 %502, %v263
    %v504 = vpop.permute.xlu0 %503
    %505 = vset.pattern.permute.xlu0 0
    %506 = vperm.xlu0 %505, %v264
    %v507 = vpop.permute.xlu0 %506
    %508 = vset.pattern.permute.xlu0 0
    %509 = vperm.xlu0 %508, %v265
    %v510 = vpop.permute.xlu0 %509
    %v511 = vlaneseq
    %v512 = vshrl.u32 %v511, 7
    %v513 = vsub.s32 0, %v512
    %v514 = vrot.slane %v266, %v513
    %v515 = vlaneseq
    %v516 = vshrl.u32 %v515, 7
    %v517 = vsub.s32 0, %v516
    %v518 = vrot.slane %v267, %v517
    %v519 = vlaneseq
    %v520 = vshrl.u32 %v519, 7
    %v521 = vsub.s32 0, %v520
    %v522 = vrot.slane %v268, %v521
    %v523 = vlaneseq
    %v524 = vshrl.u32 %v523, 7
    %v525 = vsub.s32 0, %v524
    %v526 = vrot.slane %v269, %v525
    %v527 = vlaneseq
    %v528 = vshrl.u32 %v527, 7
    %v529 = vsub.s32 0, %v528
    %v530 = vrot.slane %v270, %v529
    %vm531 = vcmp.eq.s32.totalorder %v273, %v514
    %vm532 = vcmp.eq.s32.totalorder %v276, %v514
    %vm533 = vcmp.eq.s32.totalorder %v279, %v514
    %vm534 = vcmp.eq.s32.totalorder %v282, %v514
    %vm535 = vcmp.eq.s32.totalorder %v285, %v514
    %vm536 = vcmp.eq.s32.totalorder %v288, %v514
    %vm537 = vcmp.eq.s32.totalorder %v291, %v514
    %vm538 = vcmp.eq.s32.totalorder %v294, %v514
    %vm539 = vcmp.eq.s32.totalorder %v297, %v514
    %vm540 = vcmp.eq.s32.totalorder %v300, %v514
    %vm541 = vcmp.eq.s32.totalorder %v303, %v514
    %vm542 = vcmp.eq.s32.totalorder %v306, %v514
    %vm543 = vcmp.eq.s32.totalorder %v309, %v514
    %vm544 = vcmp.eq.s32.totalorder %v312, %v514
    %vm545 = vcmp.eq.s32.totalorder %v315, %v514
    %vm546 = vcmp.eq.s32.totalorder %v318, %v514
    %vm547 = vcmp.eq.s32.totalorder %v321, %v518
    %vm548 = vcmp.eq.s32.totalorder %v324, %v518
    %vm549 = vcmp.eq.s32.totalorder %v327, %v518
    %vm550 = vcmp.eq.s32.totalorder %v330, %v518
    %vm551 = vcmp.eq.s32.totalorder %v333, %v518
    %vm552 = vcmp.eq.s32.totalorder %v336, %v518
    %vm553 = vcmp.eq.s32.totalorder %v339, %v518
    %vm554 = vcmp.eq.s32.totalorder %v342, %v518
    %vm555 = vcmp.eq.s32.totalorder %v345, %v518
    %vm556 = vcmp.eq.s32.totalorder %v348, %v518
    %vm557 = vcmp.eq.s32.totalorder %v351, %v518
    %vm558 = vcmp.eq.s32.totalorder %v354, %v518
    %vm559 = vcmp.eq.s32.totalorder %v357, %v518
    %vm560 = vcmp.eq.s32.totalorder %v360, %v518
    %vm561 = vcmp.eq.s32.totalorder %v363, %v518
    %vm562 = vcmp.eq.s32.totalorder %v366, %v518
    %vm563 = vcmp.eq.s32.totalorder %v369, %v522
    %vm564 = vcmp.eq.s32.totalorder %v372, %v522
    %vm565 = vcmp.eq.s32.totalorder %v375, %v522
    %vm566 = vcmp.eq.s32.totalorder %v378, %v522
    %vm567 = vcmp.eq.s32.totalorder %v381, %v522
    %vm568 = vcmp.eq.s32.totalorder %v384, %v522
    %vm569 = vcmp.eq.s32.totalorder %v387, %v522
    %vm570 = vcmp.eq.s32.totalorder %v390, %v522
    %vm571 = vcmp.eq.s32.totalorder %v393, %v522
    %vm572 = vcmp.eq.s32.totalorder %v396, %v522
    %vm573 = vcmp.eq.s32.totalorder %v399, %v522
    %vm574 = vcmp.eq.s32.totalorder %v402, %v522
    %vm575 = vcmp.eq.s32.totalorder %v405, %v522
    %vm576 = vcmp.eq.s32.totalorder %v408, %v522
    %vm577 = vcmp.eq.s32.totalorder %v411, %v522
    %vm578 = vcmp.eq.s32.totalorder %v414, %v522
    %vm579 = vcmp.eq.s32.totalorder %v417, %v526
    %vm580 = vcmp.eq.s32.totalorder %v420, %v526
    %vm581 = vcmp.eq.s32.totalorder %v423, %v526
    %vm582 = vcmp.eq.s32.totalorder %v426, %v526
    %vm583 = vcmp.eq.s32.totalorder %v429, %v526
    %vm584 = vcmp.eq.s32.totalorder %v432, %v526
    %vm585 = vcmp.eq.s32.totalorder %v435, %v526
    %vm586 = vcmp.eq.s32.totalorder %v438, %v526
    %vm587 = vcmp.eq.s32.totalorder %v441, %v526
    %vm588 = vcmp.eq.s32.totalorder %v444, %v526
    %vm589 = vcmp.eq.s32.totalorder %v447, %v526
    %vm590 = vcmp.eq.s32.totalorder %v450, %v526
    %vm591 = vcmp.eq.s32.totalorder %v453, %v526
    %vm592 = vcmp.eq.s32.totalorder %v456, %v526
    %vm593 = vcmp.eq.s32.totalorder %v459, %v526
    %vm594 = vcmp.eq.s32.totalorder %v462, %v526
    %vm595 = vcmp.eq.s32.totalorder %v465, %v530
    %vm596 = vcmp.eq.s32.totalorder %v468, %v530
    %vm597 = vcmp.eq.s32.totalorder %v471, %v530
    %vm598 = vcmp.eq.s32.totalorder %v474, %v530
    %vm599 = vcmp.eq.s32.totalorder %v477, %v530
    %vm600 = vcmp.eq.s32.totalorder %v480, %v530
    %vm601 = vcmp.eq.s32.totalorder %v483, %v530
    %vm602 = vcmp.eq.s32.totalorder %v486, %v530
    %vm603 = vcmp.eq.s32.totalorder %v489, %v530
    %vm604 = vcmp.eq.s32.totalorder %v492, %v530
    %vm605 = vcmp.eq.s32.totalorder %v495, %v530
    %vm606 = vcmp.eq.s32.totalorder %v498, %v530
    %vm607 = vcmp.eq.s32.totalorder %v501, %v530
    %vm608 = vcmp.eq.s32.totalorder %v504, %v530
    %vm609 = vcmp.eq.s32.totalorder %v507, %v530
    %vm610 = vcmp.eq.s32.totalorder %v510, %v530
    %vm611 = vcmask 261120
    %v613 = vsel %vm611, %v21, 0
    %v616 = vsel %vm611, %v22, 0
    %v619 = vsel %vm611, %v23, 0
    %v622 = vsel %vm611, %v24, 0
    %v625 = vsel %vm611, %v25, 0
    %v628 = vsel %vm611, %v26, 0
    %v631 = vsel %vm611, %v27, 0
    %v634 = vsel %vm611, %v28, 0
    %v637 = vsel %vm611, %v29, 0
    %v640 = vsel %vm611, %v30, 0
    %v643 = vsel %vm611, %v31, 0
    %v646 = vsel %vm611, %v32, 0
    %v649 = vsel %vm611, %v33, 0
    %v652 = vsel %vm611, %v34, 0
    %v655 = vsel %vm611, %v35, 0
    %v658 = vsel %vm611, %v36, 0
    %660 = vmatprep.subr.mxu0 0.0
    %661 = vmatpush1.xpose.msra.mxu0 %v613
    %662 = vmatprep.subr.mxu0 0.0
    %663 = vmatpush1.xpose.msra.mxu0 %v616
    %664 = vmatprep.subr.mxu0 0.0
    %665 = vmatpush1.xpose.msra.mxu0 %v619
    %666 = vmatprep.subr.mxu0 0.0
    %667 = vmatpush1.xpose.msra.mxu0 %v622
    %668 = vmatprep.subr.mxu0 0.0
    %669 = vmatpush1.xpose.msra.mxu0 %v625
    %670 = vmatprep.subr.mxu0 0.0
    %671 = vmatpush1.xpose.msra.mxu0 %v628
    %672 = vmatprep.subr.mxu0 0.0
    %673 = vmatpush1.xpose.msra.mxu0 %v631
    %674 = vmatprep.subr.mxu0 0.0
    %675 = vmatpush1.xpose.msra.mxu0 %v634
    %676 = vmatprep.subr.mxu0 0.0
    %677 = vmatpush1.xpose.msra.mxu0 %v637
    %678 = vmatprep.subr.mxu0 0.0
    %679 = vmatpush1.xpose.msra.mxu0 %v640
    %680 = vmatprep.subr.mxu0 0.0
    %681 = vmatpush1.xpose.msra.mxu0 %v643
    %682 = vmatprep.subr.mxu0 0.0
    %683 = vmatpush1.xpose.msra.mxu0 %v646
    %684 = vmatprep.subr.mxu0 0.0
    %685 = vmatpush1.xpose.msra.mxu0 %v649
    %686 = vmatprep.subr.mxu0 0.0
    %687 = vmatpush1.xpose.msra.mxu0 %v652
    %688 = vmatprep.subr.mxu0 0.0
    %689 = vmatpush1.xpose.msra.mxu0 %v655
    %690 = vmatprep.subr.mxu0 0.0
    %691 = vmatpush1.xpose.msra.mxu0 %v658
    %692 = vmatprep.subr.mxu0 0.0
    %693 = vmatpush1.xpose.msra.mxu0 0.0
    %694 = vmatprep.subr.mxu0 0.0
    %695 = vmatpush1.xpose.msra.mxu0 0.0
    %696 = vmatprep.subr.mxu0 0.0
    %697 = vmatpush1.xpose.msra.mxu0 0.0
    %698 = vmatprep.subr.mxu0 0.0
    %699 = vmatpush1.xpose.msra.mxu0 0.0
    %700 = vmatprep.subr.mxu0 0.0
    %701 = vmatpush1.xpose.msra.mxu0 0.0
    %702 = vmatprep.subr.mxu0 0.0
    %703 = vmatpush1.xpose.msra.mxu0 0.0
    %704 = vmatprep.subr.mxu0 0.0
    %705 = vmatpush1.xpose.msra.mxu0 0.0
    %706 = vmatprep.subr.mxu0 0.0
    %707 = vmatpush1.xpose.msra.mxu0 0.0
    %708 = vmatprep.subr.mxu0 0.0
    %709 = vmatpush1.xpose.msra.mxu0 0.0
    %710 = vmatprep.subr.mxu0 0.0
    %711 = vmatpush1.xpose.msra.mxu0 0.0
    %712 = vmatprep.subr.mxu0 0.0
    %713 = vmatpush1.xpose.msra.mxu0 0.0
    %714 = vmatprep.subr.mxu0 0.0
    %715 = vmatpush1.xpose.msra.mxu0 0.0
    %716 = vmatprep.subr.mxu0 0.0
    %717 = vmatpush1.xpose.msra.mxu0 0.0
    %718 = vmatprep.subr.mxu0 0.0
    %719 = vmatpush1.xpose.msra.mxu0 0.0
    %720 = vmatprep.subr.mxu0 0.0
    %721 = vmatpush1.xpose.msra.mxu0 0.0
    %722 = vmatprep.subr.mxu0 0.0
    %723 = vmatpush1.xpose.msra.mxu0 0.0
    %724 = vmatprep.mubr.f32.mxu0 0.0
    %725 = vmatmul.mubr.f32.gmra.mrb[0].mxu0 %v613
    %v726 = vpop.f32.mrb[0].mxu0
    %v727 = vadd.f32 0.0, %v726
    %v728 = vpop.f32.mrb[0].mxu0
    %729 = vmatprep.mubr.f32.mxu0 0.0
    %730 = vmatmul.mubr.f32.gmra.mrb[0].mxu0 %v616
    %v731 = vpop.f32.mrb[0].mxu0
    %v732 = vadd.f32 0.0, %v731
    %v733 = vpop.f32.mrb[0].mxu0
    %734 = vmatprep.mubr.f32.mxu0 0.0
    %735 = vmatmul.mubr.f32.gmra.mrb[0].mxu0 %v619
    %v736 = vpop.f32.mrb[0].mxu0
    %v737 = vadd.f32 0.0, %v736
    %v738 = vpop.f32.mrb[0].mxu0
    %739 = vmatprep.mubr.f32.mxu0 0.0
    %740 = vmatmul.mubr.f32.gmra.mrb[0].mxu0 %v622
    %v741 = vpop.f32.mrb[0].mxu0
    %v742 = vadd.f32 0.0, %v741
    %v743 = vpop.f32.mrb[0].mxu0
    %744 = vmatprep.mubr.f32.mxu0 0.0
    %745 = vmatmul.mubr.f32.gmra.mrb[0].mxu0 %v625
    %v746 = vpop.f32.mrb[0].mxu0
    %v747 = vadd.f32 0.0, %v746
    %v748 = vpop.f32.mrb[0].mxu0
    %749 = vmatprep.mubr.f32.mxu0 0.0
    %750 = vmatmul.mubr.f32.gmra.mrb[0].mxu0 %v628
    %v751 = vpop.f32.mrb[0].mxu0
    %v752 = vadd.f32 0.0, %v751
    %v753 = vpop.f32.mrb[0].mxu0
    %754 = vmatprep.mubr.f32.mxu0 0.0
    %755 = vmatmul.mubr.f32.gmra.mrb[0].mxu0 %v631
    %v756 = vpop.f32.mrb[0].mxu0
    %v757 = vadd.f32 0.0, %v756
    %v758 = vpop.f32.mrb[0].mxu0
    %759 = vmatprep.mubr.f32.mxu0 0.0
    %760 = vmatmul.mubr.f32.gmra.mrb[0].mxu0 %v634
    %v761 = vpop.f32.mrb[0].mxu0
    %v762 = vadd.f32 0.0, %v761
    %v763 = vpop.f32.mrb[0].mxu0
    %764 = vmatprep.mubr.f32.mxu0 0.0
    %765 = vmatmul.mubr.f32.gmra.mrb[0].mxu0 %v637
    %v766 = vpop.f32.mrb[0].mxu0
    %v767 = vadd.f32 0.0, %v766
    %v768 = vpop.f32.mrb[0].mxu0
    %769 = vmatprep.mubr.f32.mxu0 0.0
    %770 = vmatmul.mubr.f32.gmra.mrb[0].mxu0 %v640
    %v771 = vpop.f32.mrb[0].mxu0
    %v772 = vadd.f32 0.0, %v771
    %v773 = vpop.f32.mrb[0].mxu0
    %774 = vmatprep.mubr.f32.mxu0 0.0
    %775 = vmatmul.mubr.f32.gmra.mrb[0].mxu0 %v643
    %v776 = vpop.f32.mrb[0].mxu0
    %v777 = vadd.f32 0.0, %v776
    %v778 = vpop.f32.mrb[0].mxu0
    %779 = vmatprep.mubr.f32.mxu0 0.0
    %780 = vmatmul.mubr.f32.gmra.mrb[0].mxu0 %v646
    %v781 = vpop.f32.mrb[0].mxu0
    %v782 = vadd.f32 0.0, %v781
    %v783 = vpop.f32.mrb[0].mxu0
    %784 = vmatprep.mubr.f32.mxu0 0.0
    %785 = vmatmul.mubr.f32.gmra.mrb[0].mxu0 %v649
    %v786 = vpop.f32.mrb[0].mxu0
    %v787 = vadd.f32 0.0, %v786
    %v788 = vpop.f32.mrb[0].mxu0
    %789 = vmatprep.mubr.f32.mxu0 0.0
    %790 = vmatmul.mubr.f32.gmra.mrb[0].mxu0 %v652
    %v791 = vpop.f32.mrb[0].mxu0
    %v792 = vadd.f32 0.0, %v791
    %v793 = vpop.f32.mrb[0].mxu0
    %794 = vmatprep.mubr.f32.mxu0 0.0
    %795 = vmatmul.mubr.f32.gmra.mrb[0].mxu0 %v655
    %v796 = vpop.f32.mrb[0].mxu0
    %v797 = vadd.f32 0.0, %v796
    %v798 = vpop.f32.mrb[0].mxu0
    %799 = vmatprep.mubr.f32.mxu0 0.0
    %800 = vmatmul.mubr.f32.gmra.mrb[0].mxu0 %v658
    %v801 = vpop.f32.mrb[0].mxu0
    %v802 = vadd.f32 0.0, %v801
    %v803 = vpop.f32.mrb[0].mxu0
    %804 = vdwg.mxu0
    %v806 = vsel %vm611, %v37, 0
    %v809 = vsel %vm611, %v38, 0
    %v812 = vsel %vm611, %v39, 0
    %v815 = vsel %vm611, %v40, 0
    %v818 = vsel %vm611, %v41, 0
    %v821 = vsel %vm611, %v42, 0
    %v824 = vsel %vm611, %v43, 0
    %v827 = vsel %vm611, %v44, 0
    %v830 = vsel %vm611, %v45, 0
    %v833 = vsel %vm611, %v46, 0
    %v836 = vsel %vm611, %v47, 0
    %v839 = vsel %vm611, %v48, 0
    %v842 = vsel %vm611, %v49, 0
    %v845 = vsel %vm611, %v50, 0
    %v848 = vsel %vm611, %v51, 0
    %v851 = vsel %vm611, %v52, 0
    %853 = vmatprep.subr.mxu0 0.0
    %854 = vmatpush1.xpose.msra.mxu0 %v806
    %855 = vmatprep.subr.mxu0 0.0
    %856 = vmatpush1.xpose.msra.mxu0 %v809
    %857 = vmatprep.subr.mxu0 0.0
    %858 = vmatpush1.xpose.msra.mxu0 %v812
    %859 = vmatprep.subr.mxu0 0.0
    %860 = vmatpush1.xpose.msra.mxu0 %v815
    %861 = vmatprep.subr.mxu0 0.0
    %862 = vmatpush1.xpose.msra.mxu0 %v818
    %863 = vmatprep.subr.mxu0 0.0
    %864 = vmatpush1.xpose.msra.mxu0 %v821
    %865 = vmatprep.subr.mxu0 0.0
    %866 = vmatpush1.xpose.msra.mxu0 %v824
    %867 = vmatprep.subr.mxu0 0.0
    %868 = vmatpush1.xpose.msra.mxu0 %v827
    %869 = vmatprep.subr.mxu0 0.0
    %870 = vmatpush1.xpose.msra.mxu0 %v830
    %871 = vmatprep.subr.mxu0 0.0
    %872 = vmatpush1.xpose.msra.mxu0 %v833
    %873 = vmatprep.subr.mxu0 0.0
    %874 = vmatpush1.xpose.msra.mxu0 %v836
    %875 = vmatprep.subr.mxu0 0.0
    %876 = vmatpush1.xpose.msra.mxu0 %v839
    %877 = vmatprep.subr.mxu0 0.0
    %878 = vmatpush1.xpose.msra.mxu0 %v842
    %879 = vmatprep.subr.mxu0 0.0
    %880 = vmatpush1.xpose.msra.mxu0 %v845
    %881 = vmatprep.subr.mxu0 0.0
    %882 = vmatpush1.xpose.msra.mxu0 %v848
    %883 = vmatprep.subr.mxu0 0.0
    %884 = vmatpush1.xpose.msra.mxu0 %v851
    %885 = vmatprep.subr.mxu0 0.0
    %886 = vmatpush1.xpose.msra.mxu0 0.0
    %887 = vmatprep.subr.mxu0 0.0
    %888 = vmatpush1.xpose.msra.mxu0 0.0
    %889 = vmatprep.subr.mxu0 0.0
    %890 = vmatpush1.xpose.msra.mxu0 0.0
    %891 = vmatprep.subr.mxu0 0.0
    %892 = vmatpush1.xpose.msra.mxu0 0.0
    %893 = vmatprep.subr.mxu0 0.0
    %894 = vmatpush1.xpose.msra.mxu0 0.0
    %895 = vmatprep.subr.mxu0 0.0
    %896 = vmatpush1.xpose.msra.mxu0 0.0
    %897 = vmatprep.subr.mxu0 0.0
    %898 = vmatpush1.xpose.msra.mxu0 0.0
    %899 = vmatprep.subr.mxu0 0.0
    %900 = vmatpush1.xpose.msra.mxu0 0.0
    %901 = vmatprep.subr.mxu0 0.0
    %902 = vmatpush1.xpose.msra.mxu0 0.0
    %903 = vmatprep.subr.mxu0 0.0
    %904 = vmatpush1.xpose.msra.mxu0 0.0
    %905 = vmatprep.subr.mxu0 0.0
    %906 = vmatpush1.xpose.msra.mxu0 0.0
    %907 = vmatprep.subr.mxu0 0.0
    %908 = vmatpush1.xpose.msra.mxu0 0.0
    %909 = vmatprep.subr.mxu0 0.0
    %910 = vmatpush1.xpose.msra.mxu0 0.0
    %911 = vmatprep.subr.mxu0 0.0
    %912 = vmatpush1.xpose.msra.mxu0 0.0
    %913 = vmatprep.subr.mxu0 0.0
    %914 = vmatpush1.xpose.msra.mxu0 0.0
    %915 = vmatprep.subr.mxu0 0.0
    %916 = vmatpush1.xpose.msra.mxu0 0.0
    %917 = vmatprep.mubr.f32.mxu0 0.0
    %918 = vmatmul.mubr.f32.gmra.mrb[0].mxu0 %v806
    %v919 = vpop.f32.mrb[0].mxu0
    %v920 = vadd.f32 0.0, %v919
    %v921 = vpop.f32.mrb[0].mxu0
    %922 = vmatprep.mubr.f32.mxu0 0.0
    %923 = vmatmul.mubr.f32.gmra.mrb[0].mxu0 %v809
    %v924 = vpop.f32.mrb[0].mxu0
    %v925 = vadd.f32 0.0, %v924
    %v926 = vpop.f32.mrb[0].mxu0
    %927 = vmatprep.mubr.f32.mxu0 0.0
    %928 = vmatmul.mubr.f32.gmra.mrb[0].mxu0 %v812
    %v929 = vpop.f32.mrb[0].mxu0
    %v930 = vadd.f32 0.0, %v929
    %v931 = vpop.f32.mrb[0].mxu0
    %932 = vmatprep.mubr.f32.mxu0 0.0
    %933 = vmatmul.mubr.f32.gmra.mrb[0].mxu0 %v815
    %v934 = vpop.f32.mrb[0].mxu0
    %v935 = vadd.f32 0.0, %v934
    %v936 = vpop.f32.mrb[0].mxu0
    %937 = vmatprep.mubr.f32.mxu0 0.0
    %938 = vmatmul.mubr.f32.gmra.mrb[0].mxu0 %v818
    %v939 = vpop.f32.mrb[0].mxu0
    %v940 = vadd.f32 0.0, %v939
    %v941 = vpop.f32.mrb[0].mxu0
    %942 = vmatprep.mubr.f32.mxu0 0.0
    %943 = vmatmul.mubr.f32.gmra.mrb[0].mxu0 %v821
    %v944 = vpop.f32.mrb[0].mxu0
    %v945 = vadd.f32 0.0, %v944
    %v946 = vpop.f32.mrb[0].mxu0
    %947 = vmatprep.mubr.f32.mxu0 0.0
    %948 = vmatmul.mubr.f32.gmra.mrb[0].mxu0 %v824
    %v949 = vpop.f32.mrb[0].mxu0
    %v950 = vadd.f32 0.0, %v949
    %v951 = vpop.f32.mrb[0].mxu0
    %952 = vmatprep.mubr.f32.mxu0 0.0
    %953 = vmatmul.mubr.f32.gmra.mrb[0].mxu0 %v827
    %v954 = vpop.f32.mrb[0].mxu0
    %v955 = vadd.f32 0.0, %v954
    %v956 = vpop.f32.mrb[0].mxu0
    %957 = vmatprep.mubr.f32.mxu0 0.0
    %958 = vmatmul.mubr.f32.gmra.mrb[0].mxu0 %v830
    %v959 = vpop.f32.mrb[0].mxu0
    %v960 = vadd.f32 0.0, %v959
    %v961 = vpop.f32.mrb[0].mxu0
    %962 = vmatprep.mubr.f32.mxu0 0.0
    %963 = vmatmul.mubr.f32.gmra.mrb[0].mxu0 %v833
    %v964 = vpop.f32.mrb[0].mxu0
    %v965 = vadd.f32 0.0, %v964
    %v966 = vpop.f32.mrb[0].mxu0
    %967 = vmatprep.mubr.f32.mxu0 0.0
    %968 = vmatmul.mubr.f32.gmra.mrb[0].mxu0 %v836
    %v969 = vpop.f32.mrb[0].mxu0
    %v970 = vadd.f32 0.0, %v969
    %v971 = vpop.f32.mrb[0].mxu0
    %972 = vmatprep.mubr.f32.mxu0 0.0
    %973 = vmatmul.mubr.f32.gmra.mrb[0].mxu0 %v839
    %v974 = vpop.f32.mrb[0].mxu0
    %v975 = vadd.f32 0.0, %v974
    %v976 = vpop.f32.mrb[0].mxu0
    %977 = vmatprep.mubr.f32.mxu0 0.0
    %978 = vmatmul.mubr.f32.gmra.mrb[0].mxu0 %v842
    %v979 = vpop.f32.mrb[0].mxu0
    %v980 = vadd.f32 0.0, %v979
    %v981 = vpop.f32.mrb[0].mxu0
    %982 = vmatprep.mubr.f32.mxu0 0.0
    %983 = vmatmul.mubr.f32.gmra.mrb[0].mxu0 %v845
    %v984 = vpop.f32.mrb[0].mxu0
    %v985 = vadd.f32 0.0, %v984
    %v986 = vpop.f32.mrb[0].mxu0
    %987 = vmatprep.mubr.f32.mxu0 0.0
    %988 = vmatmul.mubr.f32.gmra.mrb[0].mxu0 %v848
    %v989 = vpop.f32.mrb[0].mxu0
    %v990 = vadd.f32 0.0, %v989
    %v991 = vpop.f32.mrb[0].mxu0
    %992 = vmatprep.mubr.f32.mxu0 0.0
    %993 = vmatmul.mubr.f32.gmra.mrb[0].mxu0 %v851
    %v994 = vpop.f32.mrb[0].mxu0
    %v995 = vadd.f32 0.0, %v994
    %v996 = vpop.f32.mrb[0].mxu0
    %997 = vdwg.mxu0
    %v999 = vsel %vm611, %v53, 0
    %v1002 = vsel %vm611, %v54, 0
    %v1005 = vsel %vm611, %v55, 0
    %v1008 = vsel %vm611, %v56, 0
    %v1011 = vsel %vm611, %v57, 0
    %v1014 = vsel %vm611, %v58, 0
    %v1017 = vsel %vm611, %v59, 0
    %v1020 = vsel %vm611, %v60, 0
    %v1023 = vsel %vm611, %v61, 0
    %v1026 = vsel %vm611, %v62, 0
    %v1029 = vsel %vm611, %v63, 0
    %v1032 = vsel %vm611, %v64, 0
    %v1035 = vsel %vm611, %v65, 0
    %v1038 = vsel %vm611, %v66, 0
    %v1041 = vsel %vm611, %v67, 0
    %v1044 = vsel %vm611, %v68, 0
    %1046 = vmatprep.subr.mxu0 0.0
    %1047 = vmatpush1.xpose.msra.mxu0 %v999
    %1048 = vmatprep.subr.mxu0 0.0
    %1049 = vmatpush1.xpose.msra.mxu0 %v1002
    %1050 = vmatprep.subr.mxu0 0.0
    %1051 = vmatpush1.xpose.msra.mxu0 %v1005
    %1052 = vmatprep.subr.mxu0 0.0
    %1053 = vmatpush1.xpose.msra.mxu0 %v1008
    %1054 = vmatprep.subr.mxu0 0.0
    %1055 = vmatpush1.xpose.msra.mxu0 %v1011
    %1056 = vmatprep.subr.mxu0 0.0
    %1057 = vmatpush1.xpose.msra.mxu0 %v1014
    %1058 = vmatprep.subr.mxu0 0.0
    %1059 = vmatpush1.xpose.msra.mxu0 %v1017
    %1060 = vmatprep.subr.mxu0 0.0
    %1061 = vmatpush1.xpose.msra.mxu0 %v1020
    %1062 = vmatprep.subr.mxu0 0.0
    %1063 = vmatpush1.xpose.msra.mxu0 %v1023
    %1064 = vmatprep.subr.mxu0 0.0
    %1065 = vmatpush1.xpose.msra.mxu0 %v1026
    %1066 = vmatprep.subr.mxu0 0.0
    %1067 = vmatpush1.xpose.msra.mxu0 %v1029
    %1068 = vmatprep.subr.mxu0 0.0
    %1069 = vmatpush1.xpose.msra.mxu0 %v1032
    %1070 = vmatprep.subr.mxu0 0.0
    %1071 = vmatpush1.xpose.msra.mxu0 %v1035
    %1072 = vmatprep.subr.mxu0 0.0
    %1073 = vmatpush1.xpose.msra.mxu0 %v1038
    %1074 = vmatprep.subr.mxu0 0.0
    %1075 = vmatpush1.xpose.msra.mxu0 %v1041
    %1076 = vmatprep.subr.mxu0 0.0
    %1077 = vmatpush1.xpose.msra.mxu0 %v1044
    %1078 = vmatprep.subr.mxu0 0.0
    %1079 = vmatpush1.xpose.msra.mxu0 0.0
    %1080 = vmatprep.subr.mxu0 0.0
    %1081 = vmatpush1.xpose.msra.mxu0 0.0
    %1082 = vmatprep.subr.mxu0 0.0
    %1083 = vmatpush1.xpose.msra.mxu0 0.0
    %1084 = vmatprep.subr.mxu0 0.0
    %1085 = vmatpush1.xpose.msra.mxu0 0.0
    %1086 = vmatprep.subr.mxu0 0.0
    %1087 = vmatpush1.xpose.msra.mxu0 0.0
    %1088 = vmatprep.subr.mxu0 0.0
    %1089 = vmatpush1.xpose.msra.mxu0 0.0
    %1090 = vmatprep.subr.mxu0 0.0
    %1091 = vmatpush1.xpose.msra.mxu0 0.0
    %1092 = vmatprep.subr.mxu0 0.0
    %1093 = vmatpush1.xpose.msra.mxu0 0.0
    %1094 = vmatprep.subr.mxu0 0.0
    %1095 = vmatpush1.xpose.msra.mxu0 0.0
    %1096 = vmatprep.subr.mxu0 0.0
    %1097 = vmatpush1.xpose.msra.mxu0 0.0
    %1098 = vmatprep.subr.mxu0 0.0
    %1099 = vmatpush1.xpose.msra.mxu0 0.0
    %1100 = vmatprep.subr.mxu0 0.0
    %1101 = vmatpush1.xpose.msra.mxu0 0.0
    %1102 = vmatprep.subr.mxu0 0.0
    %1103 = vmatpush1.xpose.msra.mxu0 0.0
    %1104 = vmatprep.subr.mxu0 0.0
    %1105 = vmatpush1.xpose.msra.mxu0 0.0
    %1106 = vmatprep.subr.mxu0 0.0
    %1107 = vmatpush1.xpose.msra.mxu0 0.0
    %1108 = vmatprep.subr.mxu0 0.0
    %1109 = vmatpush1.xpose.msra.mxu0 0.0
    %1110 = vmatprep.mubr.f32.mxu0 0.0
    %1111 = vmatmul.mubr.f32.gmra.mrb[0].mxu0 %v999
    %v1112 = vpop.f32.mrb[0].mxu0
    %v1113 = vadd.f32 0.0, %v1112
    %v1114 = vpop.f32.mrb[0].mxu0
    %1115 = vmatprep.mubr.f32.mxu0 0.0
    %1116 = vmatmul.mubr.f32.gmra.mrb[0].mxu0 %v1002
    %v1117 = vpop.f32.mrb[0].mxu0
    %v1118 = vadd.f32 0.0, %v1117
    %v1119 = vpop.f32.mrb[0].mxu0
    %1120 = vmatprep.mubr.f32.mxu0 0.0
    %1121 = vmatmul.mubr.f32.gmra.mrb[0].mxu0 %v1005
    %v1122 = vpop.f32.mrb[0].mxu0
    %v1123 = vadd.f32 0.0, %v1122
    %v1124 = vpop.f32.mrb[0].mxu0
    %1125 = vmatprep.mubr.f32.mxu0 0.0
    %1126 = vmatmul.mubr.f32.gmra.mrb[0].mxu0 %v1008
    %v1127 = vpop.f32.mrb[0].mxu0
    %v1128 = vadd.f32 0.0, %v1127
    %v1129 = vpop.f32.mrb[0].mxu0
    %1130 = vmatprep.mubr.f32.mxu0 0.0
    %1131 = vmatmul.mubr.f32.gmra.mrb[0].mxu0 %v1011
    %v1132 = vpop.f32.mrb[0].mxu0
    %v1133 = vadd.f32 0.0, %v1132
    %v1134 = vpop.f32.mrb[0].mxu0
    %1135 = vmatprep.mubr.f32.mxu0 0.0
    %1136 = vmatmul.mubr.f32.gmra.mrb[0].mxu0 %v1014
    %v1137 = vpop.f32.mrb[0].mxu0
    %v1138 = vadd.f32 0.0, %v1137
    %v1139 = vpop.f32.mrb[0].mxu0
    %1140 = vmatprep.mubr.f32.mxu0 0.0
    %1141 = vmatmul.mubr.f32.gmra.mrb[0].mxu0 %v1017
    %v1142 = vpop.f32.mrb[0].mxu0
    %v1143 = vadd.f32 0.0, %v1142
    %v1144 = vpop.f32.mrb[0].mxu0
    %1145 = vmatprep.mubr.f32.mxu0 0.0
    %1146 = vmatmul.mubr.f32.gmra.mrb[0].mxu0 %v1020
    %v1147 = vpop.f32.mrb[0].mxu0
    %v1148 = vadd.f32 0.0, %v1147
    %v1149 = vpop.f32.mrb[0].mxu0
    %1150 = vmatprep.mubr.f32.mxu0 0.0
    %1151 = vmatmul.mubr.f32.gmra.mrb[0].mxu0 %v1023
    %v1152 = vpop.f32.mrb[0].mxu0
    %v1153 = vadd.f32 0.0, %v1152
    %v1154 = vpop.f32.mrb[0].mxu0
    %1155 = vmatprep.mubr.f32.mxu0 0.0
    %1156 = vmatmul.mubr.f32.gmra.mrb[0].mxu0 %v1026
    %v1157 = vpop.f32.mrb[0].mxu0
    %v1158 = vadd.f32 0.0, %v1157
    %v1159 = vpop.f32.mrb[0].mxu0
    %1160 = vmatprep.mubr.f32.mxu0 0.0
    %1161 = vmatmul.mubr.f32.gmra.mrb[0].mxu0 %v1029
    %v1162 = vpop.f32.mrb[0].mxu0
    %v1163 = vadd.f32 0.0, %v1162
    %v1164 = vpop.f32.mrb[0].mxu0
    %1165 = vmatprep.mubr.f32.mxu0 0.0
    %1166 = vmatmul.mubr.f32.gmra.mrb[0].mxu0 %v1032
    %v1167 = vpop.f32.mrb[0].mxu0
    %v1168 = vadd.f32 0.0, %v1167
    %v1169 = vpop.f32.mrb[0].mxu0
    %1170 = vmatprep.mubr.f32.mxu0 0.0
    %1171 = vmatmul.mubr.f32.gmra.mrb[0].mxu0 %v1035
    %v1172 = vpop.f32.mrb[0].mxu0
    %v1173 = vadd.f32 0.0, %v1172
    %v1174 = vpop.f32.mrb[0].mxu0
    %1175 = vmatprep.mubr.f32.mxu0 0.0
    %1176 = vmatmul.mubr.f32.gmra.mrb[0].mxu0 %v1038
    %v1177 = vpop.f32.mrb[0].mxu0
    %v1178 = vadd.f32 0.0, %v1177
    %v1179 = vpop.f32.mrb[0].mxu0
    %1180 = vmatprep.mubr.f32.mxu0 0.0
    %1181 = vmatmul.mubr.f32.gmra.mrb[0].mxu0 %v1041
    %v1182 = vpop.f32.mrb[0].mxu0
    %v1183 = vadd.f32 0.0, %v1182
    %v1184 = vpop.f32.mrb[0].mxu0
    %1185 = vmatprep.mubr.f32.mxu0 0.0
    %1186 = vmatmul.mubr.f32.gmra.mrb[0].mxu0 %v1044
    %v1187 = vpop.f32.mrb[0].mxu0
    %v1188 = vadd.f32 0.0, %v1187
    %v1189 = vpop.f32.mrb[0].mxu0
    %1190 = vdwg.mxu0
    %v1192 = vsel %vm611, %v69, 0
    %v1195 = vsel %vm611, %v70, 0
    %v1198 = vsel %vm611, %v71, 0
    %v1201 = vsel %vm611, %v72, 0
    %v1204 = vsel %vm611, %v73, 0
    %v1207 = vsel %vm611, %v74, 0
    %v1210 = vsel %vm611, %v75, 0
    %v1213 = vsel %vm611, %v76, 0
    %v1216 = vsel %vm611, %v77, 0
    %v1219 = vsel %vm611, %v78, 0
    %v1222 = vsel %vm611, %v79, 0
    %v1225 = vsel %vm611, %v80, 0
    %v1228 = vsel %vm611, %v81, 0
    %v1231 = vsel %vm611, %v82, 0
    %v1234 = vsel %vm611, %v83, 0
    %v1237 = vsel %vm611, %v84, 0
    %1239 = vmatprep.subr.mxu0 0.0
    %1240 = vmatpush1.xpose.msra.mxu0 %v1192
    %1241 = vmatprep.subr.mxu0 0.0
    %1242 = vmatpush1.xpose.msra.mxu0 %v1195
    %1243 = vmatprep.subr.mxu0 0.0
    %1244 = vmatpush1.xpose.msra.mxu0 %v1198
    %1245 = vmatprep.subr.mxu0 0.0
    %1246 = vmatpush1.xpose.msra.mxu0 %v1201
    %1247 = vmatprep.subr.mxu0 0.0
    %1248 = vmatpush1.xpose.msra.mxu0 %v1204
    %1249 = vmatprep.subr.mxu0 0.0
    %1250 = vmatpush1.xpose.msra.mxu0 %v1207
    %1251 = vmatprep.subr.mxu0 0.0
    %1252 = vmatpush1.xpose.msra.mxu0 %v1210
    %1253 = vmatprep.subr.mxu0 0.0
    %1254 = vmatpush1.xpose.msra.mxu0 %v1213
    %1255 = vmatprep.subr.mxu0 0.0
    %1256 = vmatpush1.xpose.msra.mxu0 %v1216
    %1257 = vmatprep.subr.mxu0 0.0
    %1258 = vmatpush1.xpose.msra.mxu0 %v1219
    %1259 = vmatprep.subr.mxu0 0.0
    %1260 = vmatpush1.xpose.msra.mxu0 %v1222
    %1261 = vmatprep.subr.mxu0 0.0
    %1262 = vmatpush1.xpose.msra.mxu0 %v1225
    %1263 = vmatprep.subr.mxu0 0.0
    %1264 = vmatpush1.xpose.msra.mxu0 %v1228
    %1265 = vmatprep.subr.mxu0 0.0
    %1266 = vmatpush1.xpose.msra.mxu0 %v1231
    %1267 = vmatprep.subr.mxu0 0.0
    %1268 = vmatpush1.xpose.msra.mxu0 %v1234
    %1269 = vmatprep.subr.mxu0 0.0
    %1270 = vmatpush1.xpose.msra.mxu0 %v1237
    %1271 = vmatprep.subr.mxu0 0.0
    %1272 = vmatpush1.xpose.msra.mxu0 0.0
    %1273 = vmatprep.subr.mxu0 0.0
    %1274 = vmatpush1.xpose.msra.mxu0 0.0
    %1275 = vmatprep.subr.mxu0 0.0
    %1276 = vmatpush1.xpose.msra.mxu0 0.0
    %1277 = vmatprep.subr.mxu0 0.0
    %1278 = vmatpush1.xpose.msra.mxu0 0.0
    %1279 = vmatprep.subr.mxu0 0.0
    %1280 = vmatpush1.xpose.msra.mxu0 0.0
    %1281 = vmatprep.subr.mxu0 0.0
    %1282 = vmatpush1.xpose.msra.mxu0 0.0
    %1283 = vmatprep.subr.mxu0 0.0
    %1284 = vmatpush1.xpose.msra.mxu0 0.0
    %1285 = vmatprep.subr.mxu0 0.0
    %1286 = vmatpush1.xpose.msra.mxu0 0.0
    %1287 = vmatprep.subr.mxu0 0.0
    %1288 = vmatpush1.xpose.msra.mxu0 0.0
    %1289 = vmatprep.subr.mxu0 0.0
    %1290 = vmatpush1.xpose.msra.mxu0 0.0
    %1291 = vmatprep.subr.mxu0 0.0
    %1292 = vmatpush1.xpose.msra.mxu0 0.0
    %1293 = vmatprep.subr.mxu0 0.0
    %1294 = vmatpush1.xpose.msra.mxu0 0.0
    %1295 = vmatprep.subr.mxu0 0.0
    %1296 = vmatpush1.xpose.msra.mxu0 0.0
    %1297 = vmatprep.subr.mxu0 0.0
    %1298 = vmatpush1.xpose.msra.mxu0 0.0
    %1299 = vmatprep.subr.mxu0 0.0
    %1300 = vmatpush1.xpose.msra.mxu0 0.0
    %1301 = vmatprep.subr.mxu0 0.0
    %1302 = vmatpush1.xpose.msra.mxu0 0.0
    %1303 = vmatprep.mubr.f32.mxu0 0.0
    %1304 = vmatmul.mubr.f32.gmra.mrb[0].mxu0 %v1192
    %v1305 = vpop.f32.mrb[0].mxu0
    %v1306 = vadd.f32 0.0, %v1305
    %v1307 = vpop.f32.mrb[0].mxu0
    %1308 = vmatprep.mubr.f32.mxu0 0.0
    %1309 = vmatmul.mubr.f32.gmra.mrb[0].mxu0 %v1195
    %v1310 = vpop.f32.mrb[0].mxu0
    %v1311 = vadd.f32 0.0, %v1310
    %v1312 = vpop.f32.mrb[0].mxu0
    %1313 = vmatprep.mubr.f32.mxu0 0.0
    %1314 = vmatmul.mubr.f32.gmra.mrb[0].mxu0 %v1198
    %v1315 = vpop.f32.mrb[0].mxu0
    %v1316 = vadd.f32 0.0, %v1315
    %v1317 = vpop.f32.mrb[0].mxu0
    %1318 = vmatprep.mubr.f32.mxu0 0.0
    %1319 = vmatmul.mubr.f32.gmra.mrb[0].mxu0 %v1201
    %v1320 = vpop.f32.mrb[0].mxu0
    %v1321 = vadd.f32 0.0, %v1320
    %v1322 = vpop.f32.mrb[0].mxu0
    %1323 = vmatprep.mubr.f32.mxu0 0.0
    %1324 = vmatmul.mubr.f32.gmra.mrb[0].mxu0 %v1204
    %v1325 = vpop.f32.mrb[0].mxu0
    %v1326 = vadd.f32 0.0, %v1325
    %v1327 = vpop.f32.mrb[0].mxu0
    %1328 = vmatprep.mubr.f32.mxu0 0.0
    %1329 = vmatmul.mubr.f32.gmra.mrb[0].mxu0 %v1207
    %v1330 = vpop.f32.mrb[0].mxu0
    %v1331 = vadd.f32 0.0, %v1330
    %v1332 = vpop.f32.mrb[0].mxu0
    %1333 = vmatprep.mubr.f32.mxu0 0.0
    %1334 = vmatmul.mubr.f32.gmra.mrb[0].mxu0 %v1210
    %v1335 = vpop.f32.mrb[0].mxu0
    %v1336 = vadd.f32 0.0, %v1335
    %v1337 = vpop.f32.mrb[0].mxu0
    %1338 = vmatprep.mubr.f32.mxu0 0.0
    %1339 = vmatmul.mubr.f32.gmra.mrb[0].mxu0 %v1213
    %v1340 = vpop.f32.mrb[0].mxu0
    %v1341 = vadd.f32 0.0, %v1340
    %v1342 = vpop.f32.mrb[0].mxu0
    %1343 = vmatprep.mubr.f32.mxu0 0.0
    %1344 = vmatmul.mubr.f32.gmra.mrb[0].mxu0 %v1216
    %v1345 = vpop.f32.mrb[0].mxu0
    %v1346 = vadd.f32 0.0, %v1345
    %v1347 = vpop.f32.mrb[0].mxu0
    %1348 = vmatprep.mubr.f32.mxu0 0.0
    %1349 = vmatmul.mubr.f32.gmra.mrb[0].mxu0 %v1219
    %v1350 = vpop.f32.mrb[0].mxu0
    %v1351 = vadd.f32 0.0, %v1350
    %v1352 = vpop.f32.mrb[0].mxu0
    %1353 = vmatprep.mubr.f32.mxu0 0.0
    %1354 = vmatmul.mubr.f32.gmra.mrb[0].mxu0 %v1222
    %v1355 = vpop.f32.mrb[0].mxu0
    %v1356 = vadd.f32 0.0, %v1355
    %v1357 = vpop.f32.mrb[0].mxu0
    %1358 = vmatprep.mubr.f32.mxu0 0.0
    %1359 = vmatmul.mubr.f32.gmra.mrb[0].mxu0 %v1225
    %v1360 = vpop.f32.mrb[0].mxu0
    %v1361 = vadd.f32 0.0, %v1360
    %v1362 = vpop.f32.mrb[0].mxu0
    %1363 = vmatprep.mubr.f32.mxu0 0.0
    %1364 = vmatmul.mubr.f32.gmra.mrb[0].mxu0 %v1228
    %v1365 = vpop.f32.mrb[0].mxu0
    %v1366 = vadd.f32 0.0, %v1365
    %v1367 = vpop.f32.mrb[0].mxu0
    %1368 = vmatprep.mubr.f32.mxu0 0.0
    %1369 = vmatmul.mubr.f32.gmra.mrb[0].mxu0 %v1231
    %v1370 = vpop.f32.mrb[0].mxu0
    %v1371 = vadd.f32 0.0, %v1370
    %v1372 = vpop.f32.mrb[0].mxu0
    %1373 = vmatprep.mubr.f32.mxu0 0.0
    %1374 = vmatmul.mubr.f32.gmra.mrb[0].mxu0 %v1234
    %v1375 = vpop.f32.mrb[0].mxu0
    %v1376 = vadd.f32 0.0, %v1375
    %v1377 = vpop.f32.mrb[0].mxu0
    %1378 = vmatprep.mubr.f32.mxu0 0.0
    %1379 = vmatmul.mubr.f32.gmra.mrb[0].mxu0 %v1237
    %v1380 = vpop.f32.mrb[0].mxu0
    %v1381 = vadd.f32 0.0, %v1380
    %v1382 = vpop.f32.mrb[0].mxu0
    %1383 = vdwg.mxu0
    %v1385 = vsel %vm611, %v85, 0
    %v1388 = vsel %vm611, %v86, 0
    %v1391 = vsel %vm611, %v87, 0
    %v1394 = vsel %vm611, %v88, 0
    %v1397 = vsel %vm611, %v89, 0
    %v1400 = vsel %vm611, %v90, 0
    %v1403 = vsel %vm611, %v91, 0
    %v1406 = vsel %vm611, %v92, 0
    %v1409 = vsel %vm611, %v93, 0
    %v1412 = vsel %vm611, %v94, 0
    %v1415 = vsel %vm611, %v95, 0
    %v1418 = vsel %vm611, %v96, 0
    %v1421 = vsel %vm611, %v97, 0
    %v1424 = vsel %vm611, %v98, 0
    %v1427 = vsel %vm611, %v99, 0
    %v1430 = vsel %vm611, %v100, 0
    %1432 = vmatprep.subr.mxu0 0.0
    %1433 = vmatpush1.xpose.msra.mxu0 %v1385
    %1434 = vmatprep.subr.mxu0 0.0
    %1435 = vmatpush1.xpose.msra.mxu0 %v1388
    %1436 = vmatprep.subr.mxu0 0.0
    %1437 = vmatpush1.xpose.msra.mxu0 %v1391
    %1438 = vmatprep.subr.mxu0 0.0
    %1439 = vmatpush1.xpose.msra.mxu0 %v1394
    %1440 = vmatprep.subr.mxu0 0.0
    %1441 = vmatpush1.xpose.msra.mxu0 %v1397
    %1442 = vmatprep.subr.mxu0 0.0
    %1443 = vmatpush1.xpose.msra.mxu0 %v1400
    %1444 = vmatprep.subr.mxu0 0.0
    %1445 = vmatpush1.xpose.msra.mxu0 %v1403
    %1446 = vmatprep.subr.mxu0 0.0
    %1447 = vmatpush1.xpose.msra.mxu0 %v1406
    %1448 = vmatprep.subr.mxu0 0.0
    %1449 = vmatpush1.xpose.msra.mxu0 %v1409
    %1450 = vmatprep.subr.mxu0 0.0
    %1451 = vmatpush1.xpose.msra.mxu0 %v1412
    %1452 = vmatprep.subr.mxu0 0.0
    %1453 = vmatpush1.xpose.msra.mxu0 %v1415
    %1454 = vmatprep.subr.mxu0 0.0
    %1455 = vmatpush1.xpose.msra.mxu0 %v1418
    %1456 = vmatprep.subr.mxu0 0.0
    %1457 = vmatpush1.xpose.msra.mxu0 %v1421
    %1458 = vmatprep.subr.mxu0 0.0
    %1459 = vmatpush1.xpose.msra.mxu0 %v1424
    %1460 = vmatprep.subr.mxu0 0.0
    %1461 = vmatpush1.xpose.msra.mxu0 %v1427
    %1462 = vmatprep.subr.mxu0 0.0
    %1463 = vmatpush1.xpose.msra.mxu0 %v1430
    %1464 = vmatprep.subr.mxu0 0.0
    %1465 = vmatpush1.xpose.msra.mxu0 0.0
    %1466 = vmatprep.subr.mxu0 0.0
    %1467 = vmatpush1.xpose.msra.mxu0 0.0
    %1468 = vmatprep.subr.mxu0 0.0
    %1469 = vmatpush1.xpose.msra.mxu0 0.0
    %1470 = vmatprep.subr.mxu0 0.0
    %1471 = vmatpush1.xpose.msra.mxu0 0.0
    %1472 = vmatprep.subr.mxu0 0.0
    %1473 = vmatpush1.xpose.msra.mxu0 0.0
    %1474 = vmatprep.subr.mxu0 0.0
    %1475 = vmatpush1.xpose.msra.mxu0 0.0
    %1476 = vmatprep.subr.mxu0 0.0
    %1477 = vmatpush1.xpose.msra.mxu0 0.0
    %1478 = vmatprep.subr.mxu0 0.0
    %1479 = vmatpush1.xpose.msra.mxu0 0.0
    %1480 = vmatprep.subr.mxu0 0.0
    %1481 = vmatpush1.xpose.msra.mxu0 0.0
    %1482 = vmatprep.subr.mxu0 0.0
    %1483 = vmatpush1.xpose.msra.mxu0 0.0
    %1484 = vmatprep.subr.mxu0 0.0
    %1485 = vmatpush1.xpose.msra.mxu0 0.0
    %1486 = vmatprep.subr.mxu0 0.0
    %1487 = vmatpush1.xpose.msra.mxu0 0.0
    %1488 = vmatprep.subr.mxu0 0.0
    %1489 = vmatpush1.xpose.msra.mxu0 0.0
    %1490 = vmatprep.subr.mxu0 0.0
    %1491 = vmatpush1.xpose.msra.mxu0 0.0
    %1492 = vmatprep.subr.mxu0 0.0
    %1493 = vmatpush1.xpose.msra.mxu0 0.0
    %1494 = vmatprep.subr.mxu0 0.0
    %1495 = vmatpush1.xpose.msra.mxu0 0.0
    %1496 = vmatprep.mubr.f32.mxu0 0.0
    %1497 = vmatmul.mubr.f32.gmra.mrb[0].mxu0 %v1385
    %v1498 = vpop.f32.mrb[0].mxu0
    %v1499 = vadd.f32 0.0, %v1498
    %v1500 = vpop.f32.mrb[0].mxu0
    %1501 = vmatprep.mubr.f32.mxu0 0.0
    %1502 = vmatmul.mubr.f32.gmra.mrb[0].mxu0 %v1388
    %v1503 = vpop.f32.mrb[0].mxu0
    %v1504 = vadd.f32 0.0, %v1503
    %v1505 = vpop.f32.mrb[0].mxu0
    %1506 = vmatprep.mubr.f32.mxu0 0.0
    %1507 = vmatmul.mubr.f32.gmra.mrb[0].mxu0 %v1391
    %v1508 = vpop.f32.mrb[0].mxu0
    %v1509 = vadd.f32 0.0, %v1508
    %v1510 = vpop.f32.mrb[0].mxu0
    %1511 = vmatprep.mubr.f32.mxu0 0.0
    %1512 = vmatmul.mubr.f32.gmra.mrb[0].mxu0 %v1394
    %v1513 = vpop.f32.mrb[0].mxu0
    %v1514 = vadd.f32 0.0, %v1513
    %v1515 = vpop.f32.mrb[0].mxu0
    %1516 = vmatprep.mubr.f32.mxu0 0.0
    %1517 = vmatmul.mubr.f32.gmra.mrb[0].mxu0 %v1397
    %v1518 = vpop.f32.mrb[0].mxu0
    %v1519 = vadd.f32 0.0, %v1518
    %v1520 = vpop.f32.mrb[0].mxu0
    %1521 = vmatprep.mubr.f32.mxu0 0.0
    %1522 = vmatmul.mubr.f32.gmra.mrb[0].mxu0 %v1400
    %v1523 = vpop.f32.mrb[0].mxu0
    %v1524 = vadd.f32 0.0, %v1523
    %v1525 = vpop.f32.mrb[0].mxu0
    %1526 = vmatprep.mubr.f32.mxu0 0.0
    %1527 = vmatmul.mubr.f32.gmra.mrb[0].mxu0 %v1403
    %v1528 = vpop.f32.mrb[0].mxu0
    %v1529 = vadd.f32 0.0, %v1528
    %v1530 = vpop.f32.mrb[0].mxu0
    %1531 = vmatprep.mubr.f32.mxu0 0.0
    %1532 = vmatmul.mubr.f32.gmra.mrb[0].mxu0 %v1406
    %v1533 = vpop.f32.mrb[0].mxu0
    %v1534 = vadd.f32 0.0, %v1533
    %v1535 = vpop.f32.mrb[0].mxu0
    %1536 = vmatprep.mubr.f32.mxu0 0.0
    %1537 = vmatmul.mubr.f32.gmra.mrb[0].mxu0 %v1409
    %v1538 = vpop.f32.mrb[0].mxu0
    %v1539 = vadd.f32 0.0, %v1538
    %v1540 = vpop.f32.mrb[0].mxu0
    %1541 = vmatprep.mubr.f32.mxu0 0.0
    %1542 = vmatmul.mubr.f32.gmra.mrb[0].mxu0 %v1412
    %v1543 = vpop.f32.mrb[0].mxu0
    %v1544 = vadd.f32 0.0, %v1543
    %v1545 = vpop.f32.mrb[0].mxu0
    %1546 = vmatprep.mubr.f32.mxu0 0.0
    %1547 = vmatmul.mubr.f32.gmra.mrb[0].mxu0 %v1415
    %v1548 = vpop.f32.mrb[0].mxu0
    %v1549 = vadd.f32 0.0, %v1548
    %v1550 = vpop.f32.mrb[0].mxu0
    %1551 = vmatprep.mubr.f32.mxu0 0.0
    %1552 = vmatmul.mubr.f32.gmra.mrb[0].mxu0 %v1418
    %v1553 = vpop.f32.mrb[0].mxu0
    %v1554 = vadd.f32 0.0, %v1553
    %v1555 = vpop.f32.mrb[0].mxu0
    %1556 = vmatprep.mubr.f32.mxu0 0.0
    %1557 = vmatmul.mubr.f32.gmra.mrb[0].mxu0 %v1421
    %v1558 = vpop.f32.mrb[0].mxu0
    %v1559 = vadd.f32 0.0, %v1558
    %v1560 = vpop.f32.mrb[0].mxu0
    %1561 = vmatprep.mubr.f32.mxu0 0.0
    %1562 = vmatmul.mubr.f32.gmra.mrb[0].mxu0 %v1424
    %v1563 = vpop.f32.mrb[0].mxu0
    %v1564 = vadd.f32 0.0, %v1563
    %v1565 = vpop.f32.mrb[0].mxu0
    %1566 = vmatprep.mubr.f32.mxu0 0.0
    %1567 = vmatmul.mubr.f32.gmra.mrb[0].mxu0 %v1427
    %v1568 = vpop.f32.mrb[0].mxu0
    %v1569 = vadd.f32 0.0, %v1568
    %v1570 = vpop.f32.mrb[0].mxu0
    %1571 = vmatprep.mubr.f32.mxu0 0.0
    %1572 = vmatmul.mubr.f32.gmra.mrb[0].mxu0 %v1430
    %v1573 = vpop.f32.mrb[0].mxu0
    %v1574 = vadd.f32 0.0, %v1573
    %v1575 = vpop.f32.mrb[0].mxu0
    %1576 = vdwg.mxu0
    %v1577 = vmul.f32 %v727, 2.0
    %v1578 = vmul.f32 %v732, 2.0
    %v1579 = vmul.f32 %v737, 2.0
    %v1580 = vmul.f32 %v742, 2.0
    %v1581 = vmul.f32 %v747, 2.0
    %v1582 = vmul.f32 %v752, 2.0
    %v1583 = vmul.f32 %v757, 2.0
    %v1584 = vmul.f32 %v762, 2.0
    %v1585 = vmul.f32 %v767, 2.0
    %v1586 = vmul.f32 %v772, 2.0
    %v1587 = vmul.f32 %v777, 2.0
    %v1588 = vmul.f32 %v782, 2.0
    %v1589 = vmul.f32 %v787, 2.0
    %v1590 = vmul.f32 %v792, 2.0
    %v1591 = vmul.f32 %v797, 2.0
    %v1592 = vmul.f32 %v802, 2.0
    %v1593 = vmul.f32 %v920, 2.0
    %v1594 = vmul.f32 %v925, 2.0
    %v1595 = vmul.f32 %v930, 2.0
    %v1596 = vmul.f32 %v935, 2.0
    %v1597 = vmul.f32 %v940, 2.0
    %v1598 = vmul.f32 %v945, 2.0
    %v1599 = vmul.f32 %v950, 2.0
    %v1600 = vmul.f32 %v955, 2.0
    %v1601 = vmul.f32 %v960, 2.0
    %v1602 = vmul.f32 %v965, 2.0
    %v1603 = vmul.f32 %v970, 2.0
    %v1604 = vmul.f32 %v975, 2.0
    %v1605 = vmul.f32 %v980, 2.0
    %v1606 = vmul.f32 %v985, 2.0
    %v1607 = vmul.f32 %v990, 2.0
    %v1608 = vmul.f32 %v995, 2.0
    %v1609 = vmul.f32 %v1113, 2.0
    %v1610 = vmul.f32 %v1118, 2.0
    %v1611 = vmul.f32 %v1123, 2.0
    %v1612 = vmul.f32 %v1128, 2.0
    %v1613 = vmul.f32 %v1133, 2.0
    %v1614 = vmul.f32 %v1138, 2.0
    %v1615 = vmul.f32 %v1143, 2.0
    %v1616 = vmul.f32 %v1148, 2.0
    %v1617 = vmul.f32 %v1153, 2.0
    %v1618 = vmul.f32 %v1158, 2.0
    %v1619 = vmul.f32 %v1163, 2.0
    %v1620 = vmul.f32 %v1168, 2.0
    %v1621 = vmul.f32 %v1173, 2.0
    %v1622 = vmul.f32 %v1178, 2.0
    %v1623 = vmul.f32 %v1183, 2.0
    %v1624 = vmul.f32 %v1188, 2.0
    %v1625 = vmul.f32 %v1306, 2.0
    %v1626 = vmul.f32 %v1311, 2.0
    %v1627 = vmul.f32 %v1316, 2.0
    %v1628 = vmul.f32 %v1321, 2.0
    %v1629 = vmul.f32 %v1326, 2.0
    %v1630 = vmul.f32 %v1331, 2.0
    %v1631 = vmul.f32 %v1336, 2.0
    %v1632 = vmul.f32 %v1341, 2.0
    %v1633 = vmul.f32 %v1346, 2.0
    %v1634 = vmul.f32 %v1351, 2.0
    %v1635 = vmul.f32 %v1356, 2.0
    %v1636 = vmul.f32 %v1361, 2.0
    %v1637 = vmul.f32 %v1366, 2.0
    %v1638 = vmul.f32 %v1371, 2.0
    %v1639 = vmul.f32 %v1376, 2.0
    %v1640 = vmul.f32 %v1381, 2.0
    %v1641 = vmul.f32 %v1499, 2.0
    %v1642 = vmul.f32 %v1504, 2.0
    %v1643 = vmul.f32 %v1509, 2.0
    %v1644 = vmul.f32 %v1514, 2.0
    %v1645 = vmul.f32 %v1519, 2.0
    %v1646 = vmul.f32 %v1524, 2.0
    %v1647 = vmul.f32 %v1529, 2.0
    %v1648 = vmul.f32 %v1534, 2.0
    %v1649 = vmul.f32 %v1539, 2.0
    %v1650 = vmul.f32 %v1544, 2.0
    %v1651 = vmul.f32 %v1549, 2.0
    %v1652 = vmul.f32 %v1554, 2.0
    %v1653 = vmul.f32 %v1559, 2.0
    %v1654 = vmul.f32 %v1564, 2.0
    %v1655 = vmul.f32 %v1569, 2.0
    %v1656 = vmul.f32 %v1574, 2.0
    %1658 = vset.pattern.permute.xlu0 0
    %1659 = vperm.xlu0 %1658, %v101
    %v1660 = vpop.permute.xlu0 %1659
    %1663 = vset.pattern.permute.xlu0 0
    %1664 = vperm.xlu0 %1663, %v102
    %v1665 = vpop.permute.xlu0 %1664
    %1668 = vset.pattern.permute.xlu0 0
    %1669 = vperm.xlu0 %1668, %v103
    %v1670 = vpop.permute.xlu0 %1669
    %1673 = vset.pattern.permute.xlu0 0
    %1674 = vperm.xlu0 %1673, %v104
    %v1675 = vpop.permute.xlu0 %1674
    %1678 = vset.pattern.permute.xlu0 0
    %1679 = vperm.xlu0 %1678, %v105
    %v1680 = vpop.permute.xlu0 %1679
    %1683 = vset.pattern.permute.xlu0 0
    %1684 = vperm.xlu0 %1683, %v106
    %v1685 = vpop.permute.xlu0 %1684
    %1688 = vset.pattern.permute.xlu0 0
    %1689 = vperm.xlu0 %1688, %v107
    %v1690 = vpop.permute.xlu0 %1689
    %1693 = vset.pattern.permute.xlu0 0
    %1694 = vperm.xlu0 %1693, %v108
    %v1695 = vpop.permute.xlu0 %1694
    %1698 = vset.pattern.permute.xlu0 0
    %1699 = vperm.xlu0 %1698, %v109
    %v1700 = vpop.permute.xlu0 %1699
    %1703 = vset.pattern.permute.xlu0 0
    %1704 = vperm.xlu0 %1703, %v110
    %v1705 = vpop.permute.xlu0 %1704
    %1708 = vset.pattern.permute.xlu0 0
    %1709 = vperm.xlu0 %1708, %v111
    %v1710 = vpop.permute.xlu0 %1709
    %1713 = vset.pattern.permute.xlu0 0
    %1714 = vperm.xlu0 %1713, %v112
    %v1715 = vpop.permute.xlu0 %1714
    %1718 = vset.pattern.permute.xlu0 0
    %1719 = vperm.xlu0 %1718, %v113
    %v1720 = vpop.permute.xlu0 %1719
    %1723 = vset.pattern.permute.xlu0 0
    %1724 = vperm.xlu0 %1723, %v114
    %v1725 = vpop.permute.xlu0 %1724
    %1728 = vset.pattern.permute.xlu0 0
    %1729 = vperm.xlu0 %1728, %v115
    %v1730 = vpop.permute.xlu0 %1729
    %1733 = vset.pattern.permute.xlu0 0
    %1734 = vperm.xlu0 %1733, %v116
    %v1735 = vpop.permute.xlu0 %1734
    %1738 = vset.pattern.permute.xlu0 0
    %1739 = vperm.xlu0 %1738, %v117
    %v1740 = vpop.permute.xlu0 %1739
    %1743 = vset.pattern.permute.xlu0 0
    %1744 = vperm.xlu0 %1743, %v118
    %v1745 = vpop.permute.xlu0 %1744
    %1748 = vset.pattern.permute.xlu0 0
    %1749 = vperm.xlu0 %1748, %v119
    %v1750 = vpop.permute.xlu0 %1749
    %1753 = vset.pattern.permute.xlu0 0
    %1754 = vperm.xlu0 %1753, %v120
    %v1755 = vpop.permute.xlu0 %1754
    %1758 = vset.pattern.permute.xlu0 0
    %1759 = vperm.xlu0 %1758, %v121
    %v1760 = vpop.permute.xlu0 %1759
    %1763 = vset.pattern.permute.xlu0 0
    %1764 = vperm.xlu0 %1763, %v122
    %v1765 = vpop.permute.xlu0 %1764
    %1768 = vset.pattern.permute.xlu0 0
    %1769 = vperm.xlu0 %1768, %v123
    %v1770 = vpop.permute.xlu0 %1769
    %1773 = vset.pattern.permute.xlu0 0
    %1774 = vperm.xlu0 %1773, %v124
    %v1775 = vpop.permute.xlu0 %1774
    %1778 = vset.pattern.permute.xlu0 0
    %1779 = vperm.xlu0 %1778, %v125
    %v1780 = vpop.permute.xlu0 %1779
    %1783 = vset.pattern.permute.xlu0 0
    %1784 = vperm.xlu0 %1783, %v126
    %v1785 = vpop.permute.xlu0 %1784
    %1788 = vset.pattern.permute.xlu0 0
    %1789 = vperm.xlu0 %1788, %v127
    %v1790 = vpop.permute.xlu0 %1789
    %1793 = vset.pattern.permute.xlu0 0
    %1794 = vperm.xlu0 %1793, %v128
    %v1795 = vpop.permute.xlu0 %1794
    %1798 = vset.pattern.permute.xlu0 0
    %1799 = vperm.xlu0 %1798, %v129
    %v1800 = vpop.permute.xlu0 %1799
    %1803 = vset.pattern.permute.xlu0 0
    %1804 = vperm.xlu0 %1803, %v130
    %v1805 = vpop.permute.xlu0 %1804
    %1808 = vset.pattern.permute.xlu0 0
    %1809 = vperm.xlu0 %1808, %v131
    %v1810 = vpop.permute.xlu0 %1809
    %1813 = vset.pattern.permute.xlu0 0
    %1814 = vperm.xlu0 %1813, %v132
    %v1815 = vpop.permute.xlu0 %1814
    %1818 = vset.pattern.permute.xlu0 0
    %1819 = vperm.xlu0 %1818, %v133
    %v1820 = vpop.permute.xlu0 %1819
    %1823 = vset.pattern.permute.xlu0 0
    %1824 = vperm.xlu0 %1823, %v134
    %v1825 = vpop.permute.xlu0 %1824
    %1828 = vset.pattern.permute.xlu0 0
    %1829 = vperm.xlu0 %1828, %v135
    %v1830 = vpop.permute.xlu0 %1829
    %1833 = vset.pattern.permute.xlu0 0
    %1834 = vperm.xlu0 %1833, %v136
    %v1835 = vpop.permute.xlu0 %1834
    %1838 = vset.pattern.permute.xlu0 0
    %1839 = vperm.xlu0 %1838, %v137
    %v1840 = vpop.permute.xlu0 %1839
    %1843 = vset.pattern.permute.xlu0 0
    %1844 = vperm.xlu0 %1843, %v138
    %v1845 = vpop.permute.xlu0 %1844
    %1848 = vset.pattern.permute.xlu0 0
    %1849 = vperm.xlu0 %1848, %v139
    %v1850 = vpop.permute.xlu0 %1849
    %1853 = vset.pattern.permute.xlu0 0
    %1854 = vperm.xlu0 %1853, %v140
    %v1855 = vpop.permute.xlu0 %1854
    %1858 = vset.pattern.permute.xlu0 0
    %1859 = vperm.xlu0 %1858, %v141
    %v1860 = vpop.permute.xlu0 %1859
    %1863 = vset.pattern.permute.xlu0 0
    %1864 = vperm.xlu0 %1863, %v142
    %v1865 = vpop.permute.xlu0 %1864
    %1868 = vset.pattern.permute.xlu0 0
    %1869 = vperm.xlu0 %1868, %v143
    %v1870 = vpop.permute.xlu0 %1869
    %1873 = vset.pattern.permute.xlu0 0
    %1874 = vperm.xlu0 %1873, %v144
    %v1875 = vpop.permute.xlu0 %1874
    %1878 = vset.pattern.permute.xlu0 0
    %1879 = vperm.xlu0 %1878, %v145
    %v1880 = vpop.permute.xlu0 %1879
    %1883 = vset.pattern.permute.xlu0 0
    %1884 = vperm.xlu0 %1883, %v146
    %v1885 = vpop.permute.xlu0 %1884
    %1888 = vset.pattern.permute.xlu0 0
    %1889 = vperm.xlu0 %1888, %v147
    %v1890 = vpop.permute.xlu0 %1889
    %1893 = vset.pattern.permute.xlu0 0
    %1894 = vperm.xlu0 %1893, %v148
    %v1895 = vpop.permute.xlu0 %1894
    %1898 = vset.pattern.permute.xlu0 0
    %1899 = vperm.xlu0 %1898, %v149
    %v1900 = vpop.permute.xlu0 %1899
    %1903 = vset.pattern.permute.xlu0 0
    %1904 = vperm.xlu0 %1903, %v150
    %v1905 = vpop.permute.xlu0 %1904
    %1908 = vset.pattern.permute.xlu0 0
    %1909 = vperm.xlu0 %1908, %v151
    %v1910 = vpop.permute.xlu0 %1909
    %1913 = vset.pattern.permute.xlu0 0
    %1914 = vperm.xlu0 %1913, %v152
    %v1915 = vpop.permute.xlu0 %1914
    %1918 = vset.pattern.permute.xlu0 0
    %1919 = vperm.xlu0 %1918, %v153
    %v1920 = vpop.permute.xlu0 %1919
    %1923 = vset.pattern.permute.xlu0 0
    %1924 = vperm.xlu0 %1923, %v154
    %v1925 = vpop.permute.xlu0 %1924
    %1928 = vset.pattern.permute.xlu0 0
    %1929 = vperm.xlu0 %1928, %v155
    %v1930 = vpop.permute.xlu0 %1929
    %1933 = vset.pattern.permute.xlu0 0
    %1934 = vperm.xlu0 %1933, %v156
    %v1935 = vpop.permute.xlu0 %1934
    %1938 = vset.pattern.permute.xlu0 0
    %1939 = vperm.xlu0 %1938, %v157
    %v1940 = vpop.permute.xlu0 %1939
    %1943 = vset.pattern.permute.xlu0 0
    %1944 = vperm.xlu0 %1943, %v158
    %v1945 = vpop.permute.xlu0 %1944
    %1948 = vset.pattern.permute.xlu0 0
    %1949 = vperm.xlu0 %1948, %v159
    %v1950 = vpop.permute.xlu0 %1949
    %1953 = vset.pattern.permute.xlu0 0
    %1954 = vperm.xlu0 %1953, %v160
    %v1955 = vpop.permute.xlu0 %1954
    %1958 = vset.pattern.permute.xlu0 0
    %1959 = vperm.xlu0 %1958, %v161
    %v1960 = vpop.permute.xlu0 %1959
    %1963 = vset.pattern.permute.xlu0 0
    %1964 = vperm.xlu0 %1963, %v162
    %v1965 = vpop.permute.xlu0 %1964
    %1968 = vset.pattern.permute.xlu0 0
    %1969 = vperm.xlu0 %1968, %v163
    %v1970 = vpop.permute.xlu0 %1969
    %1973 = vset.pattern.permute.xlu0 0
    %1974 = vperm.xlu0 %1973, %v164
    %v1975 = vpop.permute.xlu0 %1974
    %1978 = vset.pattern.permute.xlu0 0
    %1979 = vperm.xlu0 %1978, %v165
    %v1980 = vpop.permute.xlu0 %1979
    %1983 = vset.pattern.permute.xlu0 0
    %1984 = vperm.xlu0 %1983, %v166
    %v1985 = vpop.permute.xlu0 %1984
    %1988 = vset.pattern.permute.xlu0 0
    %1989 = vperm.xlu0 %1988, %v167
    %v1990 = vpop.permute.xlu0 %1989
    %1993 = vset.pattern.permute.xlu0 0
    %1994 = vperm.xlu0 %1993, %v168
    %v1995 = vpop.permute.xlu0 %1994
    %1998 = vset.pattern.permute.xlu0 0
    %1999 = vperm.xlu0 %1998, %v169
    %v2000 = vpop.permute.xlu0 %1999
    %2003 = vset.pattern.permute.xlu0 0
    %2004 = vperm.xlu0 %2003, %v170
    %v2005 = vpop.permute.xlu0 %2004
    %2008 = vset.pattern.permute.xlu0 0
    %2009 = vperm.xlu0 %2008, %v171
    %v2010 = vpop.permute.xlu0 %2009
    %2013 = vset.pattern.permute.xlu0 0
    %2014 = vperm.xlu0 %2013, %v172
    %v2015 = vpop.permute.xlu0 %2014
    %2018 = vset.pattern.permute.xlu0 0
    %2019 = vperm.xlu0 %2018, %v173
    %v2020 = vpop.permute.xlu0 %2019
    %2023 = vset.pattern.permute.xlu0 0
    %2024 = vperm.xlu0 %2023, %v174
    %v2025 = vpop.permute.xlu0 %2024
    %2028 = vset.pattern.permute.xlu0 0
    %2029 = vperm.xlu0 %2028, %v175
    %v2030 = vpop.permute.xlu0 %2029
    %2033 = vset.pattern.permute.xlu0 0
    %2034 = vperm.xlu0 %2033, %v176
    %v2035 = vpop.permute.xlu0 %2034
    %2038 = vset.pattern.permute.xlu0 0
    %2039 = vperm.xlu0 %2038, %v177
    %v2040 = vpop.permute.xlu0 %2039
    %2043 = vset.pattern.permute.xlu0 0
    %2044 = vperm.xlu0 %2043, %v178
    %v2045 = vpop.permute.xlu0 %2044
    %2048 = vset.pattern.permute.xlu0 0
    %2049 = vperm.xlu0 %2048, %v179
    %v2050 = vpop.permute.xlu0 %2049
    %2053 = vset.pattern.permute.xlu0 0
    %2054 = vperm.xlu0 %2053, %v180
    %v2055 = vpop.permute.xlu0 %2054
    %v2057 = vsub.f32 %v1660, %v1577
    %v2058 = vsub.f32 %v1665, %v1578
    %v2059 = vsub.f32 %v1670, %v1579
    %v2060 = vsub.f32 %v1675, %v1580
    %v2061 = vsub.f32 %v1680, %v1581
    %v2062 = vsub.f32 %v1685, %v1582
    %v2063 = vsub.f32 %v1690, %v1583
    %v2064 = vsub.f32 %v1695, %v1584
    %v2065 = vsub.f32 %v1700, %v1585
    %v2066 = vsub.f32 %v1705, %v1586
    %v2067 = vsub.f32 %v1710, %v1587
    %v2068 = vsub.f32 %v1715, %v1588
    %v2069 = vsub.f32 %v1720, %v1589
    %v2070 = vsub.f32 %v1725, %v1590
    %v2071 = vsub.f32 %v1730, %v1591
    %v2072 = vsub.f32 %v1735, %v1592
    %v2073 = vsub.f32 %v1740, %v1593
    %v2074 = vsub.f32 %v1745, %v1594
    %v2075 = vsub.f32 %v1750, %v1595
    %v2076 = vsub.f32 %v1755, %v1596
    %v2077 = vsub.f32 %v1760, %v1597
    %v2078 = vsub.f32 %v1765, %v1598
    %v2079 = vsub.f32 %v1770, %v1599
    %v2080 = vsub.f32 %v1775, %v1600
    %v2081 = vsub.f32 %v1780, %v1601
    %v2082 = vsub.f32 %v1785, %v1602
    %v2083 = vsub.f32 %v1790, %v1603
    %v2084 = vsub.f32 %v1795, %v1604
    %v2085 = vsub.f32 %v1800, %v1605
    %v2086 = vsub.f32 %v1805, %v1606
    %v2087 = vsub.f32 %v1810, %v1607
    %v2088 = vsub.f32 %v1815, %v1608
    %v2089 = vsub.f32 %v1820, %v1609
    %v2090 = vsub.f32 %v1825, %v1610
    %v2091 = vsub.f32 %v1830, %v1611
    %v2092 = vsub.f32 %v1835, %v1612
    %v2093 = vsub.f32 %v1840, %v1613
    %v2094 = vsub.f32 %v1845, %v1614
    %v2095 = vsub.f32 %v1850, %v1615
    %v2096 = vsub.f32 %v1855, %v1616
    %v2097 = vsub.f32 %v1860, %v1617
    %v2098 = vsub.f32 %v1865, %v1618
    %v2099 = vsub.f32 %v1870, %v1619
    %v2100 = vsub.f32 %v1875, %v1620
    %v2101 = vsub.f32 %v1880, %v1621
    %v2102 = vsub.f32 %v1885, %v1622
    %v2103 = vsub.f32 %v1890, %v1623
    %v2104 = vsub.f32 %v1895, %v1624
    %v2105 = vsub.f32 %v1900, %v1625
    %v2106 = vsub.f32 %v1905, %v1626
    %v2107 = vsub.f32 %v1910, %v1627
    %v2108 = vsub.f32 %v1915, %v1628
    %v2109 = vsub.f32 %v1920, %v1629
    %v2110 = vsub.f32 %v1925, %v1630
    %v2111 = vsub.f32 %v1930, %v1631
    %v2112 = vsub.f32 %v1935, %v1632
    %v2113 = vsub.f32 %v1940, %v1633
    %v2114 = vsub.f32 %v1945, %v1634
    %v2115 = vsub.f32 %v1950, %v1635
    %v2116 = vsub.f32 %v1955, %v1636
    %v2117 = vsub.f32 %v1960, %v1637
    %v2118 = vsub.f32 %v1965, %v1638
    %v2119 = vsub.f32 %v1970, %v1639
    %v2120 = vsub.f32 %v1975, %v1640
    %v2121 = vsub.f32 %v1980, %v1641
    %v2122 = vsub.f32 %v1985, %v1642
    %v2123 = vsub.f32 %v1990, %v1643
    %v2124 = vsub.f32 %v1995, %v1644
    %v2125 = vsub.f32 %v2000, %v1645
    %v2126 = vsub.f32 %v2005, %v1646
    %v2127 = vsub.f32 %v2010, %v1647
    %v2128 = vsub.f32 %v2015, %v1648
    %v2129 = vsub.f32 %v2020, %v1649
    %v2130 = vsub.f32 %v2025, %v1650
    %v2131 = vsub.f32 %v2030, %v1651
    %v2132 = vsub.f32 %v2035, %v1652
    %v2133 = vsub.f32 %v2040, %v1653
    %v2134 = vsub.f32 %v2045, %v1654
    %v2135 = vsub.f32 %v2050, %v1655
    %v2136 = vsub.f32 %v2055, %v1656
    %v2137 = vsel %vm531, %v2057, -inf
    %v2138 = vsel %vm532, %v2058, -inf
    %v2139 = vsel %vm533, %v2059, -inf
    %v2140 = vsel %vm534, %v2060, -inf
    %v2141 = vsel %vm535, %v2061, -inf
    %v2142 = vsel %vm536, %v2062, -inf
    %v2143 = vsel %vm537, %v2063, -inf
    %v2144 = vsel %vm538, %v2064, -inf
    %v2145 = vsel %vm539, %v2065, -inf
    %v2146 = vsel %vm540, %v2066, -inf
    %v2147 = vsel %vm541, %v2067, -inf
    %v2148 = vsel %vm542, %v2068, -inf
    %v2149 = vsel %vm543, %v2069, -inf
    %v2150 = vsel %vm544, %v2070, -inf
    %v2151 = vsel %vm545, %v2071, -inf
    %v2152 = vsel %vm546, %v2072, -inf
    %v2153 = vsel %vm547, %v2073, -inf
    %v2154 = vsel %vm548, %v2074, -inf
    %v2155 = vsel %vm549, %v2075, -inf
    %v2156 = vsel %vm550, %v2076, -inf
    %v2157 = vsel %vm551, %v2077, -inf
    %v2158 = vsel %vm552, %v2078, -inf
    %v2159 = vsel %vm553, %v2079, -inf
    %v2160 = vsel %vm554, %v2080, -inf
    %v2161 = vsel %vm555, %v2081, -inf
    %v2162 = vsel %vm556, %v2082, -inf
    %v2163 = vsel %vm557, %v2083, -inf
    %v2164 = vsel %vm558, %v2084, -inf
    %v2165 = vsel %vm559, %v2085, -inf
    %v2166 = vsel %vm560, %v2086, -inf
    %v2167 = vsel %vm561, %v2087, -inf
    %v2168 = vsel %vm562, %v2088, -inf
    %v2169 = vsel %vm563, %v2089, -inf
    %v2170 = vsel %vm564, %v2090, -inf
    %v2171 = vsel %vm565, %v2091, -inf
    %v2172 = vsel %vm566, %v2092, -inf
    %v2173 = vsel %vm567, %v2093, -inf
    %v2174 = vsel %vm568, %v2094, -inf
    %v2175 = vsel %vm569, %v2095, -inf
    %v2176 = vsel %vm570, %v2096, -inf
    %v2177 = vsel %vm571, %v2097, -inf
    %v2178 = vsel %vm572, %v2098, -inf
    %v2179 = vsel %vm573, %v2099, -inf
    %v2180 = vsel %vm574, %v2100, -inf
    %v2181 = vsel %vm575, %v2101, -inf
    %v2182 = vsel %vm576, %v2102, -inf
    %v2183 = vsel %vm577, %v2103, -inf
    %v2184 = vsel %vm578, %v2104, -inf
    %v2185 = vsel %vm579, %v2105, -inf
    %v2186 = vsel %vm580, %v2106, -inf
    %v2187 = vsel %vm581, %v2107, -inf
    %v2188 = vsel %vm582, %v2108, -inf
    %v2189 = vsel %vm583, %v2109, -inf
    %v2190 = vsel %vm584, %v2110, -inf
    %v2191 = vsel %vm585, %v2111, -inf
    %v2192 = vsel %vm586, %v2112, -inf
    %v2193 = vsel %vm587, %v2113, -inf
    %v2194 = vsel %vm588, %v2114, -inf
    %v2195 = vsel %vm589, %v2115, -inf
    %v2196 = vsel %vm590, %v2116, -inf
    %v2197 = vsel %vm591, %v2117, -inf
    %v2198 = vsel %vm592, %v2118, -inf
    %v2199 = vsel %vm593, %v2119, -inf
    %v2200 = vsel %vm594, %v2120, -inf
    %v2201 = vsel %vm595, %v2121, -inf
    %v2202 = vsel %vm596, %v2122, -inf
    %v2203 = vsel %vm597, %v2123, -inf
    %v2204 = vsel %vm598, %v2124, -inf
    %v2205 = vsel %vm599, %v2125, -inf
    %v2206 = vsel %vm600, %v2126, -inf
    %v2207 = vsel %vm601, %v2127, -inf
    %v2208 = vsel %vm602, %v2128, -inf
    %v2209 = vsel %vm603, %v2129, -inf
    %v2210 = vsel %vm604, %v2130, -inf
    %v2211 = vsel %vm605, %v2131, -inf
    %v2212 = vsel %vm606, %v2132, -inf
    %v2213 = vsel %vm607, %v2133, -inf
    %v2214 = vsel %vm608, %v2134, -inf
    %v2215 = vsel %vm609, %v2135, -inf
    %v2216 = vsel %vm610, %v2136, -inf
    %v2217 = vmax.f32 %v2137, %v2138
    %v2218 = vmax.f32 %v2217, %v2139
    %v2219 = vmax.f32 %v2218, %v2140
    %v2220 = vmax.f32 %v2219, %v2141
    %v2221 = vmax.f32 %v2220, %v2142
    %v2222 = vmax.f32 %v2221, %v2143
    %v2223 = vmax.f32 %v2222, %v2144
    %v2224 = vmax.f32 %v2223, %v2145
    %v2225 = vmax.f32 %v2224, %v2146
    %v2226 = vmax.f32 %v2225, %v2147
    %v2227 = vmax.f32 %v2226, %v2148
    %v2228 = vmax.f32 %v2227, %v2149
    %v2229 = vmax.f32 %v2228, %v2150
    %v2230 = vmax.f32 %v2229, %v2151
    %v2231 = vmax.f32 %v2230, %v2152
    %v2232 = vrot.slane %v2231, 4
    %v2233 = vmax.f32 %v2231, %v2232
    %v2234 = vrot.slane %v2233, 2
    %v2235 = vmax.f32 %v2233, %v2234
    %v2236 = vrot.slane %v2235, 1
    %v2237 = vmax.f32 %v2235, %v2236
    %v2238 = vmax.f32 %v2153, %v2154
    %v2239 = vmax.f32 %v2238, %v2155
    %v2240 = vmax.f32 %v2239, %v2156
    %v2241 = vmax.f32 %v2240, %v2157
    %v2242 = vmax.f32 %v2241, %v2158
    %v2243 = vmax.f32 %v2242, %v2159
    %v2244 = vmax.f32 %v2243, %v2160
    %v2245 = vmax.f32 %v2244, %v2161
    %v2246 = vmax.f32 %v2245, %v2162
    %v2247 = vmax.f32 %v2246, %v2163
    %v2248 = vmax.f32 %v2247, %v2164
    %v2249 = vmax.f32 %v2248, %v2165
    %v2250 = vmax.f32 %v2249, %v2166
    %v2251 = vmax.f32 %v2250, %v2167
    %v2252 = vmax.f32 %v2251, %v2168
    %v2253 = vrot.slane %v2252, 4
    %v2254 = vmax.f32 %v2252, %v2253
    %v2255 = vrot.slane %v2254, 2
    %v2256 = vmax.f32 %v2254, %v2255
    %v2257 = vrot.slane %v2256, 1
    %v2258 = vmax.f32 %v2256, %v2257
    %v2259 = vmax.f32 %v2169, %v2170
    %v2260 = vmax.f32 %v2259, %v2171
    %v2261 = vmax.f32 %v2260, %v2172
    %v2262 = vmax.f32 %v2261, %v2173
    %v2263 = vmax.f32 %v2262, %v2174
    %v2264 = vmax.f32 %v2263, %v2175
    %v2265 = vmax.f32 %v2264, %v2176
    %v2266 = vmax.f32 %v2265, %v2177
    %v2267 = vmax.f32 %v2266, %v2178
    %v2268 = vmax.f32 %v2267, %v2179
    %v2269 = vmax.f32 %v2268, %v2180
    %v2270 = vmax.f32 %v2269, %v2181
    %v2271 = vmax.f32 %v2270, %v2182
    %v2272 = vmax.f32 %v2271, %v2183
    %v2273 = vmax.f32 %v2272, %v2184
    %v2274 = vrot.slane %v2273, 4
    %v2275 = vmax.f32 %v2273, %v2274
    %v2276 = vrot.slane %v2275, 2
    %v2277 = vmax.f32 %v2275, %v2276
    %v2278 = vrot.slane %v2277, 1
    %v2279 = vmax.f32 %v2277, %v2278
    %v2280 = vmax.f32 %v2185, %v2186
    %v2281 = vmax.f32 %v2280, %v2187
    %v2282 = vmax.f32 %v2281, %v2188
    %v2283 = vmax.f32 %v2282, %v2189
    %v2284 = vmax.f32 %v2283, %v2190
    %v2285 = vmax.f32 %v2284, %v2191
    %v2286 = vmax.f32 %v2285, %v2192
    %v2287 = vmax.f32 %v2286, %v2193
    %v2288 = vmax.f32 %v2287, %v2194
    %v2289 = vmax.f32 %v2288, %v2195
    %v2290 = vmax.f32 %v2289, %v2196
    %v2291 = vmax.f32 %v2290, %v2197
    %v2292 = vmax.f32 %v2291, %v2198
    %v2293 = vmax.f32 %v2292, %v2199
    %v2294 = vmax.f32 %v2293, %v2200
    %v2295 = vrot.slane %v2294, 4
    %v2296 = vmax.f32 %v2294, %v2295
    %v2297 = vrot.slane %v2296, 2
    %v2298 = vmax.f32 %v2296, %v2297
    %v2299 = vrot.slane %v2298, 1
    %v2300 = vmax.f32 %v2298, %v2299
    %v2301 = vmax.f32 %v2201, %v2202
    %v2302 = vmax.f32 %v2301, %v2203
    %v2303 = vmax.f32 %v2302, %v2204
    %v2304 = vmax.f32 %v2303, %v2205
    %v2305 = vmax.f32 %v2304, %v2206
    %v2306 = vmax.f32 %v2305, %v2207
    %v2307 = vmax.f32 %v2306, %v2208
    %v2308 = vmax.f32 %v2307, %v2209
    %v2309 = vmax.f32 %v2308, %v2210
    %v2310 = vmax.f32 %v2309, %v2211
    %v2311 = vmax.f32 %v2310, %v2212
    %v2312 = vmax.f32 %v2311, %v2213
    %v2313 = vmax.f32 %v2312, %v2214
    %v2314 = vmax.f32 %v2313, %v2215
    %v2315 = vmax.f32 %v2314, %v2216
    %v2316 = vrot.slane %v2315, 4
    %v2317 = vmax.f32 %v2315, %v2316
    %v2318 = vrot.slane %v2317, 2
    %v2319 = vmax.f32 %v2317, %v2318
    %v2320 = vrot.slane %v2319, 1
    %v2321 = vmax.f32 %v2319, %v2320
    %v2322 = vsel %vm531, inf, %v2057
    %v2323 = vsel %vm532, inf, %v2058
    %v2324 = vsel %vm533, inf, %v2059
    %v2325 = vsel %vm534, inf, %v2060
    %v2326 = vsel %vm535, inf, %v2061
    %v2327 = vsel %vm536, inf, %v2062
    %v2328 = vsel %vm537, inf, %v2063
    %v2329 = vsel %vm538, inf, %v2064
    %v2330 = vsel %vm539, inf, %v2065
    %v2331 = vsel %vm540, inf, %v2066
    %v2332 = vsel %vm541, inf, %v2067
    %v2333 = vsel %vm542, inf, %v2068
    %v2334 = vsel %vm543, inf, %v2069
    %v2335 = vsel %vm544, inf, %v2070
    %v2336 = vsel %vm545, inf, %v2071
    %v2337 = vsel %vm546, inf, %v2072
    %v2338 = vsel %vm547, inf, %v2073
    %v2339 = vsel %vm548, inf, %v2074
    %v2340 = vsel %vm549, inf, %v2075
    %v2341 = vsel %vm550, inf, %v2076
    %v2342 = vsel %vm551, inf, %v2077
    %v2343 = vsel %vm552, inf, %v2078
    %v2344 = vsel %vm553, inf, %v2079
    %v2345 = vsel %vm554, inf, %v2080
    %v2346 = vsel %vm555, inf, %v2081
    %v2347 = vsel %vm556, inf, %v2082
    %v2348 = vsel %vm557, inf, %v2083
    %v2349 = vsel %vm558, inf, %v2084
    %v2350 = vsel %vm559, inf, %v2085
    %v2351 = vsel %vm560, inf, %v2086
    %v2352 = vsel %vm561, inf, %v2087
    %v2353 = vsel %vm562, inf, %v2088
    %v2354 = vsel %vm563, inf, %v2089
    %v2355 = vsel %vm564, inf, %v2090
    %v2356 = vsel %vm565, inf, %v2091
    %v2357 = vsel %vm566, inf, %v2092
    %v2358 = vsel %vm567, inf, %v2093
    %v2359 = vsel %vm568, inf, %v2094
    %v2360 = vsel %vm569, inf, %v2095
    %v2361 = vsel %vm570, inf, %v2096
    %v2362 = vsel %vm571, inf, %v2097
    %v2363 = vsel %vm572, inf, %v2098
    %v2364 = vsel %vm573, inf, %v2099
    %v2365 = vsel %vm574, inf, %v2100
    %v2366 = vsel %vm575, inf, %v2101
    %v2367 = vsel %vm576, inf, %v2102
    %v2368 = vsel %vm577, inf, %v2103
    %v2369 = vsel %vm578, inf, %v2104
    %v2370 = vsel %vm579, inf, %v2105
    %v2371 = vsel %vm580, inf, %v2106
    %v2372 = vsel %vm581, inf, %v2107
    %v2373 = vsel %vm582, inf, %v2108
    %v2374 = vsel %vm583, inf, %v2109
    %v2375 = vsel %vm584, inf, %v2110
    %v2376 = vsel %vm585, inf, %v2111
    %v2377 = vsel %vm586, inf, %v2112
    %v2378 = vsel %vm587, inf, %v2113
    %v2379 = vsel %vm588, inf, %v2114
    %v2380 = vsel %vm589, inf, %v2115
    %v2381 = vsel %vm590, inf, %v2116
    %v2382 = vsel %vm591, inf, %v2117
    %v2383 = vsel %vm592, inf, %v2118
    %v2384 = vsel %vm593, inf, %v2119
    %v2385 = vsel %vm594, inf, %v2120
    %v2386 = vsel %vm595, inf, %v2121
    %v2387 = vsel %vm596, inf, %v2122
    %v2388 = vsel %vm597, inf, %v2123
    %v2389 = vsel %vm598, inf, %v2124
    %v2390 = vsel %vm599, inf, %v2125
    %v2391 = vsel %vm600, inf, %v2126
    %v2392 = vsel %vm601, inf, %v2127
    %v2393 = vsel %vm602, inf, %v2128
    %v2394 = vsel %vm603, inf, %v2129
    %v2395 = vsel %vm604, inf, %v2130
    %v2396 = vsel %vm605, inf, %v2131
    %v2397 = vsel %vm606, inf, %v2132
    %v2398 = vsel %vm607, inf, %v2133
    %v2399 = vsel %vm608, inf, %v2134
    %v2400 = vsel %vm609, inf, %v2135
    %v2401 = vsel %vm610, inf, %v2136
    %v2402 = vmin.f32 %v2322, %v2323
    %v2403 = vmin.f32 %v2402, %v2324
    %v2404 = vmin.f32 %v2403, %v2325
    %v2405 = vmin.f32 %v2404, %v2326
    %v2406 = vmin.f32 %v2405, %v2327
    %v2407 = vmin.f32 %v2406, %v2328
    %v2408 = vmin.f32 %v2407, %v2329
    %v2409 = vmin.f32 %v2408, %v2330
    %v2410 = vmin.f32 %v2409, %v2331
    %v2411 = vmin.f32 %v2410, %v2332
    %v2412 = vmin.f32 %v2411, %v2333
    %v2413 = vmin.f32 %v2412, %v2334
    %v2414 = vmin.f32 %v2413, %v2335
    %v2415 = vmin.f32 %v2414, %v2336
    %v2416 = vmin.f32 %v2415, %v2337
    %v2417 = vrot.slane %v2416, 4
    %v2418 = vmin.f32 %v2416, %v2417
    %v2419 = vrot.slane %v2418, 2
    %v2420 = vmin.f32 %v2418, %v2419
    %v2421 = vrot.slane %v2420, 1
    %v2422 = vmin.f32 %v2420, %v2421
    %v2423 = vmin.f32 %v2338, %v2339
    %v2424 = vmin.f32 %v2423, %v2340
    %v2425 = vmin.f32 %v2424, %v2341
    %v2426 = vmin.f32 %v2425, %v2342
    %v2427 = vmin.f32 %v2426, %v2343
    %v2428 = vmin.f32 %v2427, %v2344
    %v2429 = vmin.f32 %v2428, %v2345
    %v2430 = vmin.f32 %v2429, %v2346
    %v2431 = vmin.f32 %v2430, %v2347
    %v2432 = vmin.f32 %v2431, %v2348
    %v2433 = vmin.f32 %v2432, %v2349
    %v2434 = vmin.f32 %v2433, %v2350
    %v2435 = vmin.f32 %v2434, %v2351
    %v2436 = vmin.f32 %v2435, %v2352
    %v2437 = vmin.f32 %v2436, %v2353
    %v2438 = vrot.slane %v2437, 4
    %v2439 = vmin.f32 %v2437, %v2438
    %v2440 = vrot.slane %v2439, 2
    %v2441 = vmin.f32 %v2439, %v2440
    %v2442 = vrot.slane %v2441, 1
    %v2443 = vmin.f32 %v2441, %v2442
    %v2444 = vmin.f32 %v2354, %v2355
    %v2445 = vmin.f32 %v2444, %v2356
    %v2446 = vmin.f32 %v2445, %v2357
    %v2447 = vmin.f32 %v2446, %v2358
    %v2448 = vmin.f32 %v2447, %v2359
    %v2449 = vmin.f32 %v2448, %v2360
    %v2450 = vmin.f32 %v2449, %v2361
    %v2451 = vmin.f32 %v2450, %v2362
    %v2452 = vmin.f32 %v2451, %v2363
    %v2453 = vmin.f32 %v2452, %v2364
    %v2454 = vmin.f32 %v2453, %v2365
    %v2455 = vmin.f32 %v2454, %v2366
    %v2456 = vmin.f32 %v2455, %v2367
    %v2457 = vmin.f32 %v2456, %v2368
    %v2458 = vmin.f32 %v2457, %v2369
    %v2459 = vrot.slane %v2458, 4
    %v2460 = vmin.f32 %v2458, %v2459
    %v2461 = vrot.slane %v2460, 2
    %v2462 = vmin.f32 %v2460, %v2461
    %v2463 = vrot.slane %v2462, 1
    %v2464 = vmin.f32 %v2462, %v2463
    %v2465 = vmin.f32 %v2370, %v2371
    %v2466 = vmin.f32 %v2465, %v2372
    %v2467 = vmin.f32 %v2466, %v2373
    %v2468 = vmin.f32 %v2467, %v2374
    %v2469 = vmin.f32 %v2468, %v2375
    %v2470 = vmin.f32 %v2469, %v2376
    %v2471 = vmin.f32 %v2470, %v2377
    %v2472 = vmin.f32 %v2471, %v2378
    %v2473 = vmin.f32 %v2472, %v2379
    %v2474 = vmin.f32 %v2473, %v2380
    %v2475 = vmin.f32 %v2474, %v2381
    %v2476 = vmin.f32 %v2475, %v2382
    %v2477 = vmin.f32 %v2476, %v2383
    %v2478 = vmin.f32 %v2477, %v2384
    %v2479 = vmin.f32 %v2478, %v2385
    %v2480 = vrot.slane %v2479, 4
    %v2481 = vmin.f32 %v2479, %v2480
    %v2482 = vrot.slane %v2481, 2
    %v2483 = vmin.f32 %v2481, %v2482
    %v2484 = vrot.slane %v2483, 1
    %v2485 = vmin.f32 %v2483, %v2484
    %v2486 = vmin.f32 %v2386, %v2387
    %v2487 = vmin.f32 %v2486, %v2388
    %v2488 = vmin.f32 %v2487, %v2389
    %v2489 = vmin.f32 %v2488, %v2390
    %v2490 = vmin.f32 %v2489, %v2391
    %v2491 = vmin.f32 %v2490, %v2392
    %v2492 = vmin.f32 %v2491, %v2393
    %v2493 = vmin.f32 %v2492, %v2394
    %v2494 = vmin.f32 %v2493, %v2395
    %v2495 = vmin.f32 %v2494, %v2396
    %v2496 = vmin.f32 %v2495, %v2397
    %v2497 = vmin.f32 %v2496, %v2398
    %v2498 = vmin.f32 %v2497, %v2399
    %v2499 = vmin.f32 %v2498, %v2400
    %v2500 = vmin.f32 %v2499, %v2401
    %v2501 = vrot.slane %v2500, 4
    %v2502 = vmin.f32 %v2500, %v2501
    %v2503 = vrot.slane %v2502, 2
    %v2504 = vmin.f32 %v2502, %v2503
    %v2505 = vrot.slane %v2504, 1
    %v2506 = vmin.f32 %v2504, %v2505
    %v2507 = vadd.f32 %v2237, %v181
    %v2508 = vadd.f32 %v2258, %v182
    %v2509 = vadd.f32 %v2279, %v183
    %v2510 = vadd.f32 %v2300, %v184
    %v2511 = vadd.f32 %v2321, %v185
    %v2512 = vmax.f32 %v2507, 1e-12
    %v2513 = vmax.f32 %v2508, 1e-12
    %v2514 = vmax.f32 %v2509, 1e-12
    %v2515 = vmax.f32 %v2510, 1e-12
    %v2516 = vmax.f32 %v2511, 1e-12
    %v2517 = vrsqrt.pop %v2512
    %v2518 = vmul.f32 %v2512, %v2517
    %vm2519 = vcmp.eq.f32.partialorder %v2512, inf
    %v2520 = vsel %vm2519, %v2512, %v2518
    %vm2521 = vcmp.eq.f32.partialorder %v2512, 0.0
    %v2522 = vand.u32 %v2512, 2147483648
    %v2523 = vsel %vm2521, %v2522, %v2520
    %v2524 = vrsqrt.pop %v2513
    %v2525 = vmul.f32 %v2513, %v2524
    %vm2526 = vcmp.eq.f32.partialorder %v2513, inf
    %v2527 = vsel %vm2526, %v2513, %v2525
    %vm2528 = vcmp.eq.f32.partialorder %v2513, 0.0
    %v2529 = vand.u32 %v2513, 2147483648
    %v2530 = vsel %vm2528, %v2529, %v2527
    %v2531 = vrsqrt.pop %v2514
    %v2532 = vmul.f32 %v2514, %v2531
    %vm2533 = vcmp.eq.f32.partialorder %v2514, inf
    %v2534 = vsel %vm2533, %v2514, %v2532
    %vm2535 = vcmp.eq.f32.partialorder %v2514, 0.0
    %v2536 = vand.u32 %v2514, 2147483648
    %v2537 = vsel %vm2535, %v2536, %v2534
    %v2538 = vrsqrt.pop %v2515
    %v2539 = vmul.f32 %v2515, %v2538
    %vm2540 = vcmp.eq.f32.partialorder %v2515, inf
    %v2541 = vsel %vm2540, %v2515, %v2539
    %vm2542 = vcmp.eq.f32.partialorder %v2515, 0.0
    %v2543 = vand.u32 %v2515, 2147483648
    %v2544 = vsel %vm2542, %v2543, %v2541
    %v2545 = vrsqrt.pop %v2516
    %v2546 = vmul.f32 %v2516, %v2545
    %vm2547 = vcmp.eq.f32.partialorder %v2516, inf
    %v2548 = vsel %vm2547, %v2516, %v2546
    %vm2549 = vcmp.eq.f32.partialorder %v2516, 0.0
    %v2550 = vand.u32 %v2516, 2147483648
    %v2551 = vsel %vm2549, %v2550, %v2548
    %v2552 = vadd.f32 %v2422, %v181
    %v2553 = vadd.f32 %v2443, %v182
    %v2554 = vadd.f32 %v2464, %v183
    %v2555 = vadd.f32 %v2485, %v184
    %v2556 = vadd.f32 %v2506, %v185
    %v2557 = vmax.f32 %v2552, 1e-12
    %v2558 = vmax.f32 %v2553, 1e-12
    %v2559 = vmax.f32 %v2554, 1e-12
    %v2560 = vmax.f32 %v2555, 1e-12
    %v2561 = vmax.f32 %v2556, 1e-12
    %v2562 = vrsqrt.pop %v2557
    %v2563 = vmul.f32 %v2557, %v2562
    %vm2564 = vcmp.eq.f32.partialorder %v2557, inf
    %v2565 = vsel %vm2564, %v2557, %v2563
    %vm2566 = vcmp.eq.f32.partialorder %v2557, 0.0
    %v2567 = vand.u32 %v2557, 2147483648
    %v2568 = vsel %vm2566, %v2567, %v2565
    %v2569 = vrsqrt.pop %v2558
    %v2570 = vmul.f32 %v2558, %v2569
    %vm2571 = vcmp.eq.f32.partialorder %v2558, inf
    %v2572 = vsel %vm2571, %v2558, %v2570
    %vm2573 = vcmp.eq.f32.partialorder %v2558, 0.0
    %v2574 = vand.u32 %v2558, 2147483648
    %v2575 = vsel %vm2573, %v2574, %v2572
    %v2576 = vrsqrt.pop %v2559
    %v2577 = vmul.f32 %v2559, %v2576
    %vm2578 = vcmp.eq.f32.partialorder %v2559, inf
    %v2579 = vsel %vm2578, %v2559, %v2577
    %vm2580 = vcmp.eq.f32.partialorder %v2559, 0.0
    %v2581 = vand.u32 %v2559, 2147483648
    %v2582 = vsel %vm2580, %v2581, %v2579
    %v2583 = vrsqrt.pop %v2560
    %v2584 = vmul.f32 %v2560, %v2583
    %vm2585 = vcmp.eq.f32.partialorder %v2560, inf
    %v2586 = vsel %vm2585, %v2560, %v2584
    %vm2587 = vcmp.eq.f32.partialorder %v2560, 0.0
    %v2588 = vand.u32 %v2560, 2147483648
    %v2589 = vsel %vm2587, %v2588, %v2586
    %v2590 = vrsqrt.pop %v2561
    %v2591 = vmul.f32 %v2561, %v2590
    %vm2592 = vcmp.eq.f32.partialorder %v2561, inf
    %v2593 = vsel %vm2592, %v2561, %v2591
    %vm2594 = vcmp.eq.f32.partialorder %v2561, 0.0
    %v2595 = vand.u32 %v2561, 2147483648
    %v2596 = vsel %vm2594, %v2595, %v2593
    %v2597 = vsub.f32 %v2523, %v2568
    %v2598 = vsub.f32 %v2530, %v2575
    %v2599 = vsub.f32 %v2537, %v2582
    %v2600 = vsub.f32 %v2544, %v2589
    %v2601 = vsub.f32 %v2551, %v2596
    %v2602 = vadd.f32 %v2597, 0.5
    %v2603 = vadd.f32 %v2598, 0.5
    %v2604 = vadd.f32 %v2599, 0.5
    %v2605 = vadd.f32 %v2600, 0.5
    %v2606 = vadd.f32 %v2601, 0.5
    %v2607 = vmax.f32 %v2602, 0.0
    %v2608 = vmax.f32 %v2603, 0.0
    %v2609 = vmax.f32 %v2604, 0.0
    %v2610 = vmax.f32 %v2605, 0.0
    %v2611 = vmax.f32 %v2606, 0.0
    %vm2612 = vcmask 1040384
    %v2613 = vsel %vm2612, %v2607, 0.0
    %v2614 = vsel %vm2612, %v2608, 0.0
    %v2615 = vadd.f32 %v2613, %v2614
    %v2616 = vsel %vm2612, %v2609, 0.0
    %v2617 = vadd.f32 %v2615, %v2616
    %v2618 = vsel %vm2612, %v2610, 0.0
    %v2619 = vadd.f32 %v2617, %v2618
    %v2620 = vsel %vm2612, %v2611, 0.0
    %v2621 = vadd.f32 %v2619, %v2620
    %v2622 = vsel %vm2612, %v2621, 0.0
    %2623 = vadd.xlane.f32.xlu0 %v2622
    %v2624 = vpop.xlane.xlu0 %2623
    %v2625 = vmul.f32 %v2624, 0.0078125
    %vm2626 = vcmask 0
    %2627 = vst.msk [vmem:[#allocation2] sm:$0x1] %vm2626, %v2625
    // Predicated region
    $region22: #{tpu_custom_call.1} parent=1 // pred_check
      _
    $region23: #{tpu_custom_call.1} parent=1 // pred_check_branch
      %2629 = sbr.rel (0) target = $region25
    $region24: #{tpu_custom_call.1} parent=1 // pred_region
      %s2631 = ssub.s32 16, 16
      %2632 = vsyncadd [#allocation3], %s2631
      %s2634 = sshll.u32 [#allocation2], 4
      %s2635 = int_to_ptr.vmem [resolvable:$true] %s2634
      %2637 = dma.vmem_to_hbm [thread:$0]  %s2635, 16, %s5, [#allocation3]
    $region25: #{tpu_custom_call.1} parent=1 // pred_fallthru
      _
    // Predicated region
    $region26: #{tpu_custom_call.1} parent=1 // pred_check
      _
    $region27: #{tpu_custom_call.1} parent=1 // pred_check_branch
      %2639 = sbr.rel (0) target = $region29
    $region28: #{tpu_custom_call.1} parent=1 // pred_region
      %2640 = dma.done [#allocation3], 16
    $region29: #{tpu_custom_call.1} parent=1 // pred_fallthru
      _
    %2641 = vsyncpa [#allocation3], 1

</llo_original>
